<compile_context>
chip_gen: v7x
topology: tpu7x:2x2x1
jax: 0.10.0
libtpu: 0.0.40
codegen_flags: <defaults>
</compile_context>

<pallas_src>
import functools

import jax
import jax.numpy as jnp
from jax.experimental import pallas as pl
from jax.experimental.pallas import tpu as pltpu


def _downsample_conv_kernel(x_ref, w_ref, b_ref, o_ref, *, nb, h_out, w_out,
                            c_in, c_out, flatten_w):
    # x_ref: (nb, 2, 2, hh, wh, c_in)  parity-major padded NHWC input (bf16)
    # w_ref: (9*c_in, c_out)           flattened HWIO weights (bf16)
    # b_ref: (1, c_out)                f32 bias
    # o_ref: (nb*h_out, w_out*c_out)   if flatten_w else (nb, h_out, w_out, c_out)

    # --- im2col: gather the 9 stride-2 taps straight from the ref ----------
    # padded row 2*o + dh == (half-row o + dh//2, parity dh%2); same for cols.
    taps = []
    for dh in range(3):
        hs, hb = dh // 2, dh % 2
        for dw in range(3):
            ws, wb = dw // 2, dw % 2
            taps.append(x_ref[:, hb, wb, hs:hs + h_out, ws:ws + w_out, :])
    patch = jnp.concatenate(taps, axis=-1)                 # (nb, h_out, w_out, 9*c_in)
    patch = patch.reshape(nb * h_out * w_out, 9 * c_in)    # lane dim unchanged

    # --- single fused matmul on the MXU, f32 accumulation -------------------
    y = jnp.dot(patch, w_ref[...], preferred_element_type=jnp.float32)
    # f32 bias epilogue, then cast to the output dtype BEFORE any repack so the
    # relayout below moves as few bytes as possible.
    y = (y + b_ref[...]).astype(o_ref.dtype)               # (M, c_out)

    # --- store ---------------------------------------------------------------
    if flatten_w:
        # Repack (M, c_out) -> (nb*h_out, w_out*c_out): move the w_out rows
        # into lanes so the output store is a wide unmasked vst instead of a
        # masked c_out-wide partial store.  (Only done for small c_out / w_out.)
        y = y.reshape(nb * h_out, w_out, c_out)
        y = jnp.concatenate([y[:, w, :] for w in range(w_out)], axis=-1)
        o_ref[...] = y
    else:
        o_ref[...] = y.reshape(nb, h_out, w_out, c_out)


def _largest_divisor_leq(n, k):
    k = max(1, min(n, k))
    while n % k:
        k -= 1
    return k


def downsample_block(x_nchw, w_hwio, bias, *, compute_dtype=jnp.bfloat16):
    """Pallas implementation of DownSampleBlock.forward. x_nchw: (N, C, H, W)."""
    n, c, h, wd = x_nchw.shape
    kh, kw_, c_in_w, c_out = w_hwio.shape
    assert (kh, kw_) == (3, 3) and c_in_w == c
    h_out = (h + 1 - 3) // 2 + 1
    w_out = (wd + 1 - 3) // 2 + 1

    # ---- wrapper glue: NCHW -> parity-major padded NHWC --------------------
    x = jnp.transpose(x_nchw, (0, 2, 3, 1))                # NHWC
    # F.pad((0,1,0,1)) pads right/bottom by one zero.  Pad up to the next even
    # size (1 or 2 zeros); the extra row/col is never reached by valid taps.
    pad_h = 2 - (h % 2)
    pad_w = 2 - (wd % 2)
    x = jnp.pad(x, ((0, 0), (0, pad_h), (0, pad_w), (0, 0)))
    hh, wh = (h + pad_h) // 2, (wd + pad_w) // 2           # == h_out+1, w_out+1
    x = x.reshape(n, hh, 2, wh, 2, c)                      # (n, hh, hp, wh, wp, c)
    x = jnp.transpose(x, (0, 2, 4, 1, 3, 5))               # (n, 2, 2, hh, wh, c)
    x = x.astype(compute_dtype)

    w2 = w_hwio.reshape(9 * c, c_out).astype(compute_dtype)   # (9*C, C) weight slab
    b2 = bias.reshape(1, c_out).astype(jnp.float32)

    # ---- batch blocking: amortize grid overhead, stay inside VMEM ----------
    itemsize = jnp.dtype(compute_dtype).itemsize
    sub = 8 * (4 // itemsize)                              # sublane packing
    per_image_vmem = (2 * 2 * hh
                      * (-(-wh // sub) * sub)
                      * (-(-c // 128) * 128) * itemsize)   # padded-tile footprint
    budget = 4 * 1024 * 1024                               # per input block (x2 buffers)
    nb = _largest_divisor_leq(n, max(1, budget // max(per_image_vmem, 1)))
    grid = (n // nb,)

    # Lane-dense output repack only pays off for small c_out; for c_out >= 128
    # the NHWC store is already full-lane-width.
    flatten_w = (c_out < 128) and (w_out <= 64) and ((nb * h_out) % 8 == 0 or nb == n)

    if flatten_w:
        out_shape = jax.ShapeDtypeStruct((n * h_out, w_out * c_out), x_nchw.dtype)
        out_specs = pl.BlockSpec((nb * h_out, w_out * c_out), lambda i: (i, 0))
    else:
        out_shape = jax.ShapeDtypeStruct((n, h_out, w_out, c_out), x_nchw.dtype)
        out_specs = pl.BlockSpec((nb, h_out, w_out, c_out), lambda i: (i, 0, 0, 0))

    kernel = functools.partial(
        _downsample_conv_kernel, nb=nb, h_out=h_out, w_out=w_out,
        c_in=c, c_out=c_out, flatten_w=flatten_w)

    out = pl.pallas_call(
        kernel,
        out_shape=out_shape,
        grid=grid,
        in_specs=[
            pl.BlockSpec((nb, 2, 2, hh, wh, c), lambda i: (i, 0, 0, 0, 0, 0)),
            pl.BlockSpec((9 * c, c_out), lambda i: (0, 0)),     # weights: resident
            pl.BlockSpec((1, c_out), lambda i: (0, 0)),         # bias: resident
        ],
        out_specs=out_specs,
        compiler_params=pltpu.CompilerParams(
            dimension_semantics=("parallel",),
            vmem_limit_bytes=32 * 1024 * 1024,
        ),
    )(x, w2, b2)

    if flatten_w:
        out = out.reshape(n, h_out, w_out, c_out)
    # NHWC -> NCHW to match the PyTorch module's output convention.
    return jnp.transpose(out, (0, 3, 1, 2))


if __name__ == "__main__":
    key = jax.random.PRNGKey(0)
    kx, kw, kb = jax.random.split(key, 3)

    N, C, H, W = 2, 4, 16, 16
    x = jax.random.normal(kx, (N, C, H, W), dtype=jnp.float32)

    # Deterministic "Conv2d(C, C, 3)" parameters (kaiming-style uniform scale).
    fan_in = C * 3 * 3
    limit = 1.0 / jnp.sqrt(jnp.float32(fan_in))
    w_hwio = jax.random.uniform(kw, (3, 3, C, C), jnp.float32, -limit, limit)
    bias = jax.random.uniform(kb, (C,), jnp.float32, -limit, limit)

    out = jax.jit(downsample_block)(x, w_hwio, bias)
    out = jax.block_until_ready(out)
    h_out = (H + 1 - 3) // 2 + 1
    w_out = (W + 1 - 3) // 2 + 1
    assert out.shape == (N, C, h_out, w_out)

    # Cross-check against XLA's conv (same semantics as the PyTorch module).
    x_pad = jnp.pad(x, ((0, 0), (0, 0), (0, 1), (0, 1)))          # F.pad((0,1,0,1))
    w_oihw = jnp.transpose(w_hwio, (3, 2, 0, 1))
    # (a) bf16-operand / f32-accumulate reference: same arithmetic as the kernel.
    ref_bf16 = jax.lax.conv_general_dilated(
        x_pad.astype(jnp.bfloat16), w_oihw.astype(jnp.bfloat16),
        window_strides=(2, 2), padding="VALID",
        dimension_numbers=("NCHW", "OIHW", "NCHW"),
        preferred_element_type=jnp.float32,
    ) + bias[None, :, None, None]
    # (b) full-f32 reference: loose tolerance covering bf16 operand rounding.
    ref_f32 = jax.lax.conv_general_dilated(
        x_pad, w_oihw, window_strides=(2, 2), padding="VALID",
        dimension_numbers=("NCHW", "OIHW", "NCHW"),
    ) + bias[None, :, None, None]

    err_a = float(jnp.max(jnp.abs(out - ref_bf16)))
    err_b = float(jnp.max(jnp.abs(out - ref_f32)))
    assert jnp.allclose(out, ref_bf16, atol=5e-3, rtol=5e-3), err_a
    assert jnp.allclose(out, ref_f32, atol=5e-2, rtol=5e-2), err_b

    print("KERNEL_OK")
</pallas_src>

<mosaic_0001>
module attributes {stable_mosaic.version = 11 : i64} {
  func.func @_downsample_conv_kernel(%arg0: i32, %arg1: memref<2x2x2x9x9x4xbf16, #tpu.memory_space<vmem>>, %arg2: memref<36x4xbf16, #tpu.memory_space<vmem>>, %arg3: memref<1x4xf32, #tpu.memory_space<vmem>>, %arg4: memref<16x32xf32, #tpu.memory_space<vmem>>) attributes {dimension_semantics = [#tpu.dimension_semantics<parallel>], iteration_bounds = array<i64: 1>, scalar_prefetch = 0 : i64, scratch_operands = 0 : i64, tpu.core_type = #tpu.core_type<tc>, window_params = [{transform_indices = @transform_0, window_bounds = array<i64: 2, 2, 2, 9, 9, 4>}, {pipeline_mode = #tpu.pipeline_mode<synchronous>, transform_indices = @transform_1, window_bounds = array<i64: 36, 4>}, {pipeline_mode = #tpu.pipeline_mode<synchronous>, transform_indices = @transform_2, window_bounds = array<i64: 1, 4>}, {transform_indices = @transform_3, window_bounds = array<i64: 16, 32>}]} {
    %c0 = arith.constant 0 : index
    %c0_0 = arith.constant 0 : index
    %c0_1 = arith.constant 0 : index
    %c0_2 = arith.constant 0 : index
    %c0_3 = arith.constant 0 : index
    %c0_4 = arith.constant 0 : index
    %0 = vector.load %arg1[%c0, %c0_0, %c0_1, %c0_2, %c0_3, %c0_4] : memref<2x2x2x9x9x4xbf16, #tpu.memory_space<vmem>>, vector<2x1x1x8x8x4xbf16>
    %1 = vector.shape_cast %0 : vector<2x1x1x8x8x4xbf16> to vector<2x8x8x4xbf16>
    %c0_5 = arith.constant 0 : index
    %c0_6 = arith.constant 0 : index
    %c1 = arith.constant 1 : index
    %c0_7 = arith.constant 0 : index
    %c0_8 = arith.constant 0 : index
    %c0_9 = arith.constant 0 : index
    %2 = vector.load %arg1[%c0_5, %c0_6, %c1, %c0_7, %c0_8, %c0_9] : memref<2x2x2x9x9x4xbf16, #tpu.memory_space<vmem>>, vector<2x1x1x8x8x4xbf16>
    %3 = vector.shape_cast %2 : vector<2x1x1x8x8x4xbf16> to vector<2x8x8x4xbf16>
    %c0_10 = arith.constant 0 : index
    %c0_11 = arith.constant 0 : index
    %c0_12 = arith.constant 0 : index
    %c0_13 = arith.constant 0 : index
    %c1_14 = arith.constant 1 : index
    %c0_15 = arith.constant 0 : index
    %4 = vector.load %arg1[%c0_10, %c0_11, %c0_12, %c0_13, %c1_14, %c0_15] : memref<2x2x2x9x9x4xbf16, #tpu.memory_space<vmem>>, vector<2x1x1x8x8x4xbf16>
    %5 = vector.shape_cast %4 : vector<2x1x1x8x8x4xbf16> to vector<2x8x8x4xbf16>
    %c0_16 = arith.constant 0 : index
    %c1_17 = arith.constant 1 : index
    %c0_18 = arith.constant 0 : index
    %c0_19 = arith.constant 0 : index
    %c0_20 = arith.constant 0 : index
    %c0_21 = arith.constant 0 : index
    %6 = vector.load %arg1[%c0_16, %c1_17, %c0_18, %c0_19, %c0_20, %c0_21] : memref<2x2x2x9x9x4xbf16, #tpu.memory_space<vmem>>, vector<2x1x1x8x8x4xbf16>
    %7 = vector.shape_cast %6 : vector<2x1x1x8x8x4xbf16> to vector<2x8x8x4xbf16>
    %c0_22 = arith.constant 0 : index
    %c1_23 = arith.constant 1 : index
    %c1_24 = arith.constant 1 : index
    %c0_25 = arith.constant 0 : index
    %c0_26 = arith.constant 0 : index
    %c0_27 = arith.constant 0 : index
    %8 = vector.load %arg1[%c0_22, %c1_23, %c1_24, %c0_25, %c0_26, %c0_27] : memref<2x2x2x9x9x4xbf16, #tpu.memory_space<vmem>>, vector<2x1x1x8x8x4xbf16>
    %9 = vector.shape_cast %8 : vector<2x1x1x8x8x4xbf16> to vector<2x8x8x4xbf16>
    %c0_28 = arith.constant 0 : index
    %c1_29 = arith.constant 1 : index
    %c0_30 = arith.constant 0 : index
    %c0_31 = arith.constant 0 : index
    %c1_32 = arith.constant 1 : index
    %c0_33 = arith.constant 0 : index
    %10 = vector.load %arg1[%c0_28, %c1_29, %c0_30, %c0_31, %c1_32, %c0_33] : memref<2x2x2x9x9x4xbf16, #tpu.memory_space<vmem>>, vector<2x1x1x8x8x4xbf16>
    %11 = vector.shape_cast %10 : vector<2x1x1x8x8x4xbf16> to vector<2x8x8x4xbf16>
    %c0_34 = arith.constant 0 : index
    %c0_35 = arith.constant 0 : index
    %c0_36 = arith.constant 0 : index
    %c1_37 = arith.constant 1 : index
    %c0_38 = arith.constant 0 : index
    %c0_39 = arith.constant 0 : index
    %12 = vector.load %arg1[%c0_34, %c0_35, %c0_36, %c1_37, %c0_38, %c0_39] : memref<2x2x2x9x9x4xbf16, #tpu.memory_space<vmem>>, vector<2x1x1x8x8x4xbf16>
    %13 = vector.shape_cast %12 : vector<2x1x1x8x8x4xbf16> to vector<2x8x8x4xbf16>
    %c0_40 = arith.constant 0 : index
    %c0_41 = arith.constant 0 : index
    %c1_42 = arith.constant 1 : index
    %c1_43 = arith.constant 1 : index
    %c0_44 = arith.constant 0 : index
    %c0_45 = arith.constant 0 : index
    %14 = vector.load %arg1[%c0_40, %c0_41, %c1_42, %c1_43, %c0_44, %c0_45] : memref<2x2x2x9x9x4xbf16, #tpu.memory_space<vmem>>, vector<2x1x1x8x8x4xbf16>
    %15 = vector.shape_cast %14 : vector<2x1x1x8x8x4xbf16> to vector<2x8x8x4xbf16>
    %c0_46 = arith.constant 0 : index
    %c0_47 = arith.constant 0 : index
    %c0_48 = arith.constant 0 : index
    %c1_49 = arith.constant 1 : index
    %c1_50 = arith.constant 1 : index
    %c0_51 = arith.constant 0 : index
    %16 = vector.load %arg1[%c0_46, %c0_47, %c0_48, %c1_49, %c1_50, %c0_51] : memref<2x2x2x9x9x4xbf16, #tpu.memory_space<vmem>>, vector<2x1x1x8x8x4xbf16>
    %17 = vector.shape_cast %16 : vector<2x1x1x8x8x4xbf16> to vector<2x8x8x4xbf16>
    %18 = tpu.concatenate %1, %3, %5, %7, %9, %11, %13, %15, %17 in 3 : vector<2x8x8x4xbf16>, vector<2x8x8x4xbf16>, vector<2x8x8x4xbf16>, vector<2x8x8x4xbf16>, vector<2x8x8x4xbf16>, vector<2x8x8x4xbf16>, vector<2x8x8x4xbf16>, vector<2x8x8x4xbf16>, vector<2x8x8x4xbf16> -> vector<2x8x8x36xbf16>
    %19 = vector.shape_cast %18 : vector<2x8x8x36xbf16> to vector<128x36xbf16>
    %c0_52 = arith.constant 0 : index
    %c0_53 = arith.constant 0 : index
    %20 = vector.load %arg2[%c0_52, %c0_53] : memref<36x4xbf16, #tpu.memory_space<vmem>>, vector<36x4xbf16>
    %cst = arith.constant dense<0.000000e+00> : vector<128x4xf32>
    %21 = tpu.matmul %19, %20, %cst {dimension_numbers = #tpu.dot_dimension_numbers<[1], [0], [0], [1], [0, 0, 1, 1], [], []>} : vector<128x36xbf16>, vector<36x4xbf16>, vector<128x4xf32> -> vector<128x4xf32>
    %c0_54 = arith.constant 0 : index
    %c0_55 = arith.constant 0 : index
    %22 = vector.load %arg3[%c0_54, %c0_55] : memref<1x4xf32, #tpu.memory_space<vmem>>, vector<1x4xf32>
    %23 = vector.broadcast %22 : vector<1x4xf32> to vector<128x4xf32>
    %24 = arith.addf %21, %23 : vector<128x4xf32>
    %25 = vector.shape_cast %24 : vector<128x4xf32> to vector<16x8x4xf32>
    %26 = vector.extract_strided_slice %25 {offsets = [0, 0, 0], sizes = [16, 1, 4], strides = [1, 1, 1]} : vector<16x8x4xf32> to vector<16x1x4xf32>
    %27 = vector.shape_cast %26 : vector<16x1x4xf32> to vector<16x4xf32>
    %28 = vector.extract_strided_slice %25 {offsets = [0, 1, 0], sizes = [16, 1, 4], strides = [1, 1, 1]} : vector<16x8x4xf32> to vector<16x1x4xf32>
    %29 = vector.shape_cast %28 : vector<16x1x4xf32> to vector<16x4xf32>
    %30 = vector.extract_strided_slice %25 {offsets = [0, 2, 0], sizes = [16, 1, 4], strides = [1, 1, 1]} : vector<16x8x4xf32> to vector<16x1x4xf32>
    %31 = vector.shape_cast %30 : vector<16x1x4xf32> to vector<16x4xf32>
    %32 = vector.extract_strided_slice %25 {offsets = [0, 3, 0], sizes = [16, 1, 4], strides = [1, 1, 1]} : vector<16x8x4xf32> to vector<16x1x4xf32>
    %33 = vector.shape_cast %32 : vector<16x1x4xf32> to vector<16x4xf32>
    %34 = vector.extract_strided_slice %25 {offsets = [0, 4, 0], sizes = [16, 1, 4], strides = [1, 1, 1]} : vector<16x8x4xf32> to vector<16x1x4xf32>
    %35 = vector.shape_cast %34 : vector<16x1x4xf32> to vector<16x4xf32>
    %36 = vector.extract_strided_slice %25 {offsets = [0, 5, 0], sizes = [16, 1, 4], strides = [1, 1, 1]} : vector<16x8x4xf32> to vector<16x1x4xf32>
    %37 = vector.shape_cast %36 : vector<16x1x4xf32> to vector<16x4xf32>
    %38 = vector.extract_strided_slice %25 {offsets = [0, 6, 0], sizes = [16, 1, 4], strides = [1, 1, 1]} : vector<16x8x4xf32> to vector<16x1x4xf32>
    %39 = vector.shape_cast %38 : vector<16x1x4xf32> to vector<16x4xf32>
    %40 = vector.extract_strided_slice %25 {offsets = [0, 7, 0], sizes = [16, 1, 4], strides = [1, 1, 1]} : vector<16x8x4xf32> to vector<16x1x4xf32>
    %41 = vector.shape_cast %40 : vector<16x1x4xf32> to vector<16x4xf32>
    %42 = tpu.concatenate %27, %29, %31, %33, %35, %37, %39, %41 in 1 : vector<16x4xf32>, vector<16x4xf32>, vector<16x4xf32>, vector<16x4xf32>, vector<16x4xf32>, vector<16x4xf32>, vector<16x4xf32>, vector<16x4xf32> -> vector<16x32xf32>
    %c0_56 = arith.constant 0 : index
    %c0_57 = arith.constant 0 : index
    %43 = vector.load %arg4[%c0_56, %c0_57] : memref<16x32xf32, #tpu.memory_space<vmem>>, vector<16x32xf32>
    tpu.vector_store %arg4[%c0_56, %c0_57], %42 {strides = array<i32>} : memref<16x32xf32, #tpu.memory_space<vmem>>, vector<16x32xf32>,
    return
  }
  func.func @transform_0(%arg0: i32) -> (i32, i32, i32, i32, i32, i32) {
    %c0_i32 = arith.constant 0 : i32
    %c0_i32_0 = arith.constant 0 : i32
    %c0_i32_1 = arith.constant 0 : i32
    %c0_i32_2 = arith.constant 0 : i32
    %c0_i32_3 = arith.constant 0 : i32
    %c0_i32_4 = arith.constant 0 : i32
    return %arg0, %c0_i32, %c0_i32_0, %c0_i32_1, %c0_i32_2, %c0_i32_3 : i32, i32, i32, i32, i32, i32
  }
  func.func @transform_1(%arg0: i32) -> (i32, i32) {
    %c0_i32 = arith.constant 0 : i32
    %c0_i32_0 = arith.constant 0 : i32
    %c0_i32_1 = arith.constant 0 : i32
    return %c0_i32, %c0_i32_0 : i32, i32
  }
  func.func @transform_2(%arg0: i32) -> (i32, i32) {
    %c0_i32 = arith.constant 0 : i32
    %c0_i32_0 = arith.constant 0 : i32
    %c0_i32_1 = arith.constant 0 : i32
    return %c0_i32, %c0_i32_0 : i32, i32
  }
  func.func @transform_3(%arg0: i32) -> (i32, i32) {
    %c0_i32 = arith.constant 0 : i32
    %c0_i32_0 = arith.constant 0 : i32
    return %arg0, %c0_i32 : i32, i32
  }
}

</mosaic_0001>

<llo_original>
// kernel: downsample_block.1
$region0: #{downsample_block.1}
  #allocation0 [shape = 'u32[]', space=smem, size = 0x4, offset = 0x4, fixed_abs, tag = 'smem constant byte address 0x4 - core index']
  #allocation1 [shape = 'u32[144,128]{1,0:T(1,128)}', space=vmem, size = 0x12000, scoped, tag = 'internal scratch']
  %s0 = inlined_call_operand.vmem [shape: bf16[2,2,2,9,9,4], index: 0, kind: input, shape index: {}]
  %s1 = inlined_call_operand.vmem [shape: bf16[36,4], index: 1, kind: input, shape index: {}]
  %s2 = inlined_call_operand.vmem [shape: f32[1,4], index: 2, kind: input, shape index: {}]
  %s3 = inlined_call_operand.vmem [shape: f32[16,32], index: 3, kind: output, shape index: {}]
  %s4 = sld [smem:[#allocation0]]
  $region22: #{downsample_block.1} parent=0
    _
  %s6 = ssub.s32 1, %s4
  %s7 = scalar_select 0, %s6, %s4
  // Predicated region
  $region2: #{downsample_block.1} parent=0 // pred_check
    _
  $region3: #{downsample_block.1} parent=0 // pred_check_branch
    %9 = sbr.rel (0) target = $region5
  $region4: #{downsample_block.1} parent=0 // pred_region
    _
  $region5: #{downsample_block.1} parent=0 // pred_fallthru
    _
  // Predicated region
  $region6: #{downsample_block.1} parent=0 // pred_check
    _
  $region7: #{downsample_block.1} parent=0 // pred_check_branch
    %11 = sbr.rel (0) target = $region9
  $region8: #{downsample_block.1} parent=0 // pred_region
    _
  $region9: #{downsample_block.1} parent=0 // pred_fallthru
    _
  // Predicated region
  $region10: #{downsample_block.1} parent=0 // pred_check
    _
  $region11: #{downsample_block.1} parent=0 // pred_check_branch
    %13 = sbr.rel (0) target = $region13
  $region12: #{downsample_block.1} parent=0 // pred_region
    _
  $region13: #{downsample_block.1} parent=0 // pred_fallthru
    _
  %v15 = vld [vmem:[%s0] sm:$0xf]
  %v16 = vld [vmem:[%s0 + $0x8] sm:$0xf]
  %v17 = vld [vmem:[%s0 + $0x10] sm:$0xf]
  %v18 = vld [vmem:[%s0 + $0x18] sm:$0xf]
  %v19 = vld [vmem:[%s0 + $0x20] sm:$0xf]
  %v20 = vld [vmem:[%s0 + $0x28] sm:$0xf]
  %v21 = vld [vmem:[%s0 + $0x30] sm:$0xf]
  %v22 = vld [vmem:[%s0 + $0x38] sm:$0xf]
  %v23 = vld [vmem:[%s0 + $0x120] sm:$0xf]
  %v24 = vld [vmem:[%s0 + $0x128] sm:$0xf]
  %v25 = vld [vmem:[%s0 + $0x130] sm:$0xf]
  %v26 = vld [vmem:[%s0 + $0x138] sm:$0xf]
  %v27 = vld [vmem:[%s0 + $0x140] sm:$0xf]
  %v28 = vld [vmem:[%s0 + $0x148] sm:$0xf]
  %v29 = vld [vmem:[%s0 + $0x150] sm:$0xf]
  %v30 = vld [vmem:[%s0 + $0x158] sm:$0xf]
  %s31 = scalar_lea.vmem %s0, 72
  %v32 = vld [vmem:[%s31] sm:$0xf]
  %v33 = vld [vmem:[%s31 + $0x8] sm:$0xf]
  %v34 = vld [vmem:[%s31 + $0x10] sm:$0xf]
  %v35 = vld [vmem:[%s31 + $0x18] sm:$0xf]
  %v36 = vld [vmem:[%s31 + $0x20] sm:$0xf]
  %v37 = vld [vmem:[%s31 + $0x28] sm:$0xf]
  %v38 = vld [vmem:[%s31 + $0x30] sm:$0xf]
  %v39 = vld [vmem:[%s31 + $0x38] sm:$0xf]
  %v40 = vld [vmem:[%s31 + $0x120] sm:$0xf]
  %v41 = vld [vmem:[%s31 + $0x128] sm:$0xf]
  %v42 = vld [vmem:[%s31 + $0x130] sm:$0xf]
  %v43 = vld [vmem:[%s31 + $0x138] sm:$0xf]
  %v44 = vld [vmem:[%s31 + $0x140] sm:$0xf]
  %v45 = vld [vmem:[%s31 + $0x148] sm:$0xf]
  %v46 = vld [vmem:[%s31 + $0x150] sm:$0xf]
  %v47 = vld [vmem:[%s31 + $0x158] sm:$0xf]
  %v48 = vld [vmem:[%s0 + $0x4] sm:$0x1]
  %v49 = vld [vmem:[%s0 + $0xc] sm:$0x1]
  %v50 = vld [vmem:[%s0 + $0x14] sm:$0x1]
  %v51 = vld [vmem:[%s0 + $0x1c] sm:$0x1]
  %v52 = vld [vmem:[%s0 + $0x24] sm:$0x1]
  %v53 = vld [vmem:[%s0 + $0x2c] sm:$0x1]
  %v54 = vld [vmem:[%s0 + $0x34] sm:$0x1]
  %v55 = vld [vmem:[%s0 + $0x3c] sm:$0x1]
  %v56 = vld [vmem:[%s0 + $0x124] sm:$0x1]
  %v57 = vld [vmem:[%s0 + $0x12c] sm:$0x1]
  %v58 = vld [vmem:[%s0 + $0x134] sm:$0x1]
  %v59 = vld [vmem:[%s0 + $0x13c] sm:$0x1]
  %v60 = vld [vmem:[%s0 + $0x144] sm:$0x1]
  %v61 = vld [vmem:[%s0 + $0x14c] sm:$0x1]
  %v62 = vld [vmem:[%s0 + $0x154] sm:$0x1]
  %v63 = vld [vmem:[%s0 + $0x15c] sm:$0x1]
  %s64 = scalar_lea.vmem %s0, 144
  %v65 = vld [vmem:[%s64] sm:$0xf]
  %v66 = vld [vmem:[%s64 + $0x8] sm:$0xf]
  %v67 = vld [vmem:[%s64 + $0x10] sm:$0xf]
  %v68 = vld [vmem:[%s64 + $0x18] sm:$0xf]
  %v69 = vld [vmem:[%s64 + $0x20] sm:$0xf]
  %v70 = vld [vmem:[%s64 + $0x28] sm:$0xf]
  %v71 = vld [vmem:[%s64 + $0x30] sm:$0xf]
  %v72 = vld [vmem:[%s64 + $0x38] sm:$0xf]
  %v73 = vld [vmem:[%s64 + $0x120] sm:$0xf]
  %v74 = vld [vmem:[%s64 + $0x128] sm:$0xf]
  %v75 = vld [vmem:[%s64 + $0x130] sm:$0xf]
  %v76 = vld [vmem:[%s64 + $0x138] sm:$0xf]
  %v77 = vld [vmem:[%s64 + $0x140] sm:$0xf]
  %v78 = vld [vmem:[%s64 + $0x148] sm:$0xf]
  %v79 = vld [vmem:[%s64 + $0x150] sm:$0xf]
  %v80 = vld [vmem:[%s64 + $0x158] sm:$0xf]
  %s81 = scalar_lea.vmem %s0, 216
  %v82 = vld [vmem:[%s81] sm:$0xf]
  %v83 = vld [vmem:[%s81 + $0x8] sm:$0xf]
  %v84 = vld [vmem:[%s81 + $0x10] sm:$0xf]
  %v85 = vld [vmem:[%s81 + $0x18] sm:$0xf]
  %v86 = vld [vmem:[%s81 + $0x20] sm:$0xf]
  %v87 = vld [vmem:[%s81 + $0x28] sm:$0xf]
  %v88 = vld [vmem:[%s81 + $0x30] sm:$0xf]
  %v89 = vld [vmem:[%s81 + $0x38] sm:$0xf]
  %v90 = vld [vmem:[%s81 + $0x120] sm:$0xf]
  %v91 = vld [vmem:[%s81 + $0x128] sm:$0xf]
  %v92 = vld [vmem:[%s81 + $0x130] sm:$0xf]
  %v93 = vld [vmem:[%s81 + $0x138] sm:$0xf]
  %v94 = vld [vmem:[%s81 + $0x140] sm:$0xf]
  %v95 = vld [vmem:[%s81 + $0x148] sm:$0xf]
  %v96 = vld [vmem:[%s81 + $0x150] sm:$0xf]
  %v97 = vld [vmem:[%s81 + $0x158] sm:$0xf]
  %v98 = vld [vmem:[%s64 + $0x4] sm:$0x1]
  %v99 = vld [vmem:[%s64 + $0xc] sm:$0x1]
  %v100 = vld [vmem:[%s64 + $0x14] sm:$0x1]
  %v101 = vld [vmem:[%s64 + $0x1c] sm:$0x1]
  %v102 = vld [vmem:[%s64 + $0x24] sm:$0x1]
  %v103 = vld [vmem:[%s64 + $0x2c] sm:$0x1]
  %v104 = vld [vmem:[%s64 + $0x34] sm:$0x1]
  %v105 = vld [vmem:[%s64 + $0x3c] sm:$0x1]
  %v106 = vld [vmem:[%s64 + $0x124] sm:$0x1]
  %v107 = vld [vmem:[%s64 + $0x12c] sm:$0x1]
  %v108 = vld [vmem:[%s64 + $0x134] sm:$0x1]
  %v109 = vld [vmem:[%s64 + $0x13c] sm:$0x1]
  %v110 = vld [vmem:[%s64 + $0x144] sm:$0x1]
  %v111 = vld [vmem:[%s64 + $0x14c] sm:$0x1]
  %v112 = vld [vmem:[%s64 + $0x154] sm:$0x1]
  %v113 = vld [vmem:[%s64 + $0x15c] sm:$0x1]
  %s114 = scalar_lea.vmem %s0, 8
  %v115 = vld [vmem:[%s114] sm:$0xf]
  %v116 = vld [vmem:[%s114 + $0x8] sm:$0xf]
  %v117 = vld [vmem:[%s114 + $0x10] sm:$0xf]
  %v118 = vld [vmem:[%s114 + $0x18] sm:$0xf]
  %v119 = vld [vmem:[%s114 + $0x20] sm:$0xf]
  %v120 = vld [vmem:[%s114 + $0x28] sm:$0xf]
  %v121 = vld [vmem:[%s114 + $0x30] sm:$0xf]
  %v122 = vld [vmem:[%s114 + $0x38] sm:$0xf]
  %v123 = vld [vmem:[%s114 + $0x120] sm:$0xf]
  %v124 = vld [vmem:[%s114 + $0x128] sm:$0xf]
  %v125 = vld [vmem:[%s114 + $0x130] sm:$0xf]
  %v126 = vld [vmem:[%s114 + $0x138] sm:$0xf]
  %v127 = vld [vmem:[%s114 + $0x140] sm:$0xf]
  %v128 = vld [vmem:[%s114 + $0x148] sm:$0xf]
  %v129 = vld [vmem:[%s114 + $0x150] sm:$0xf]
  %v130 = vld [vmem:[%s114 + $0x158] sm:$0xf]
  %s131 = scalar_lea.vmem %s0, 80
  %v132 = vld [vmem:[%s131] sm:$0xf]
  %v133 = vld [vmem:[%s131 + $0x8] sm:$0xf]
  %v134 = vld [vmem:[%s131 + $0x10] sm:$0xf]
  %v135 = vld [vmem:[%s131 + $0x18] sm:$0xf]
  %v136 = vld [vmem:[%s131 + $0x20] sm:$0xf]
  %v137 = vld [vmem:[%s131 + $0x28] sm:$0xf]
  %v138 = vld [vmem:[%s131 + $0x30] sm:$0xf]
  %v139 = vld [vmem:[%s131 + $0x38] sm:$0xf]
  %v140 = vld [vmem:[%s131 + $0x120] sm:$0xf]
  %v141 = vld [vmem:[%s131 + $0x128] sm:$0xf]
  %v142 = vld [vmem:[%s131 + $0x130] sm:$0xf]
  %v143 = vld [vmem:[%s131 + $0x138] sm:$0xf]
  %v144 = vld [vmem:[%s131 + $0x140] sm:$0xf]
  %v145 = vld [vmem:[%s131 + $0x148] sm:$0xf]
  %v146 = vld [vmem:[%s131 + $0x150] sm:$0xf]
  %v147 = vld [vmem:[%s131 + $0x158] sm:$0xf]
  %v148 = vld [vmem:[%s114 + $0x4] sm:$0x1]
  %v149 = vld [vmem:[%s114 + $0xc] sm:$0x1]
  %v150 = vld [vmem:[%s114 + $0x14] sm:$0x1]
  %v151 = vld [vmem:[%s114 + $0x1c] sm:$0x1]
  %v152 = vld [vmem:[%s114 + $0x24] sm:$0x1]
  %v153 = vld [vmem:[%s114 + $0x2c] sm:$0x1]
  %v154 = vld [vmem:[%s114 + $0x34] sm:$0x1]
  %v155 = vld [vmem:[%s114 + $0x3c] sm:$0x1]
  %v156 = vld [vmem:[%s114 + $0x124] sm:$0x1]
  %v157 = vld [vmem:[%s114 + $0x12c] sm:$0x1]
  %v158 = vld [vmem:[%s114 + $0x134] sm:$0x1]
  %v159 = vld [vmem:[%s114 + $0x13c] sm:$0x1]
  %v160 = vld [vmem:[%s114 + $0x144] sm:$0x1]
  %v161 = vld [vmem:[%s114 + $0x14c] sm:$0x1]
  %v162 = vld [vmem:[%s114 + $0x154] sm:$0x1]
  %v163 = vld [vmem:[%s114 + $0x15c] sm:$0x1]
  %v180 = vunpack.c.l.b16 %v32
  %v181 = vunpack.c.l.b16 %v33
  %v182 = vunpack.c.l.b16 %v34
  %v183 = vunpack.c.l.b16 %v35
  %v184 = vunpack.c.l.b16 %v36
  %v185 = vunpack.c.l.b16 %v37
  %v186 = vunpack.c.l.b16 %v38
  %v187 = vunpack.c.l.b16 %v39
  %v188 = vunpack.c.l.b16 %v40
  %v189 = vunpack.c.l.b16 %v41
  %v190 = vunpack.c.l.b16 %v42
  %v191 = vunpack.c.l.b16 %v43
  %v192 = vunpack.c.l.b16 %v44
  %v193 = vunpack.c.l.b16 %v45
  %v194 = vunpack.c.l.b16 %v46
  %v195 = vunpack.c.l.b16 %v47
  %v196 = vpack.c.b16 %v180, %v180
  %v197 = vpack.c.b16 %v181, %v181
  %v198 = vpack.c.b16 %v182, %v182
  %v199 = vpack.c.b16 %v183, %v183
  %v200 = vpack.c.b16 %v184, %v184
  %v201 = vpack.c.b16 %v185, %v185
  %v202 = vpack.c.b16 %v186, %v186
  %v203 = vpack.c.b16 %v187, %v187
  %v204 = vpack.c.b16 %v188, %v188
  %v205 = vpack.c.b16 %v189, %v189
  %v206 = vpack.c.b16 %v190, %v190
  %v207 = vpack.c.b16 %v191, %v191
  %v208 = vpack.c.b16 %v192, %v192
  %v209 = vpack.c.b16 %v193, %v193
  %v210 = vpack.c.b16 %v194, %v194
  %v211 = vpack.c.b16 %v195, %v195
  %212 = vrot.lane.b32.xlu0 %v196, 4
  %v213 = vpop.permute.xlu0 %212
  %214 = vrot.lane.b32.xlu0 %v197, 4
  %v215 = vpop.permute.xlu0 %214
  %216 = vrot.lane.b32.xlu0 %v198, 4
  %v217 = vpop.permute.xlu0 %216
  %218 = vrot.lane.b32.xlu0 %v199, 4
  %v219 = vpop.permute.xlu0 %218
  %220 = vrot.lane.b32.xlu0 %v200, 4
  %v221 = vpop.permute.xlu0 %220
  %222 = vrot.lane.b32.xlu0 %v201, 4
  %v223 = vpop.permute.xlu0 %222
  %224 = vrot.lane.b32.xlu0 %v202, 4
  %v225 = vpop.permute.xlu0 %224
  %226 = vrot.lane.b32.xlu0 %v203, 4
  %v227 = vpop.permute.xlu0 %226
  %228 = vrot.lane.b32.xlu0 %v204, 4
  %v229 = vpop.permute.xlu0 %228
  %230 = vrot.lane.b32.xlu0 %v205, 4
  %v231 = vpop.permute.xlu0 %230
  %232 = vrot.lane.b32.xlu0 %v206, 4
  %v233 = vpop.permute.xlu0 %232
  %234 = vrot.lane.b32.xlu0 %v207, 4
  %v235 = vpop.permute.xlu0 %234
  %236 = vrot.lane.b32.xlu0 %v208, 4
  %v237 = vpop.permute.xlu0 %236
  %238 = vrot.lane.b32.xlu0 %v209, 4
  %v239 = vpop.permute.xlu0 %238
  %240 = vrot.lane.b32.xlu0 %v210, 4
  %v241 = vpop.permute.xlu0 %240
  %242 = vrot.lane.b32.xlu0 %v211, 4
  %v243 = vpop.permute.xlu0 %242
  %v276 = vunpack.c.l.b16 %v15
  %v277 = vunpack.c.l.b16 %v48
  %v278 = vunpack.c.l.b16 %v16
  %v279 = vunpack.c.l.b16 %v49
  %v280 = vunpack.c.l.b16 %v17
  %v281 = vunpack.c.l.b16 %v50
  %v282 = vunpack.c.l.b16 %v18
  %v283 = vunpack.c.l.b16 %v51
  %v284 = vunpack.c.l.b16 %v19
  %v285 = vunpack.c.l.b16 %v52
  %v286 = vunpack.c.l.b16 %v20
  %v287 = vunpack.c.l.b16 %v53
  %v288 = vunpack.c.l.b16 %v21
  %v289 = vunpack.c.l.b16 %v54
  %v290 = vunpack.c.l.b16 %v22
  %v291 = vunpack.c.l.b16 %v55
  %v292 = vunpack.c.l.b16 %v23
  %v293 = vunpack.c.l.b16 %v56
  %v294 = vunpack.c.l.b16 %v24
  %v295 = vunpack.c.l.b16 %v57
  %v296 = vunpack.c.l.b16 %v25
  %v297 = vunpack.c.l.b16 %v58
  %v298 = vunpack.c.l.b16 %v26
  %v299 = vunpack.c.l.b16 %v59
  %v300 = vunpack.c.l.b16 %v27
  %v301 = vunpack.c.l.b16 %v60
  %v302 = vunpack.c.l.b16 %v28
  %v303 = vunpack.c.l.b16 %v61
  %v304 = vunpack.c.l.b16 %v29
  %v305 = vunpack.c.l.b16 %v62
  %v306 = vunpack.c.l.b16 %v30
  %v307 = vunpack.c.l.b16 %v63
  %v308 = vpack.c.b16 %v277, %v276
  %v309 = vpack.c.b16 %v279, %v278
  %v310 = vpack.c.b16 %v281, %v280
  %v311 = vpack.c.b16 %v283, %v282
  %v312 = vpack.c.b16 %v285, %v284
  %v313 = vpack.c.b16 %v287, %v286
  %v314 = vpack.c.b16 %v289, %v288
  %v315 = vpack.c.b16 %v291, %v290
  %v316 = vpack.c.b16 %v293, %v292
  %v317 = vpack.c.b16 %v295, %v294
  %v318 = vpack.c.b16 %v297, %v296
  %v319 = vpack.c.b16 %v299, %v298
  %v320 = vpack.c.b16 %v301, %v300
  %v321 = vpack.c.b16 %v303, %v302
  %v322 = vpack.c.b16 %v305, %v304
  %v323 = vpack.c.b16 %v307, %v306
  %v325 = vshrl.u32 %v308, 16
  %v327 = vshll.u32 %v308, 16
  %v329 = vrot.slane %v327, 1
  %v330 = vor.u32 %v325, %v329
  %v332 = vshrl.u32 %v309, 16
  %v334 = vshll.u32 %v309, 16
  %v336 = vrot.slane %v334, 1
  %v337 = vor.u32 %v332, %v336
  %v339 = vshrl.u32 %v310, 16
  %v341 = vshll.u32 %v310, 16
  %v343 = vrot.slane %v341, 1
  %v344 = vor.u32 %v339, %v343
  %v346 = vshrl.u32 %v311, 16
  %v348 = vshll.u32 %v311, 16
  %v350 = vrot.slane %v348, 1
  %v351 = vor.u32 %v346, %v350
  %v353 = vshrl.u32 %v312, 16
  %v355 = vshll.u32 %v312, 16
  %v357 = vrot.slane %v355, 1
  %v358 = vor.u32 %v353, %v357
  %v360 = vshrl.u32 %v313, 16
  %v362 = vshll.u32 %v313, 16
  %v364 = vrot.slane %v362, 1
  %v365 = vor.u32 %v360, %v364
  %v367 = vshrl.u32 %v314, 16
  %v369 = vshll.u32 %v314, 16
  %v371 = vrot.slane %v369, 1
  %v372 = vor.u32 %v367, %v371
  %v374 = vshrl.u32 %v315, 16
  %v376 = vshll.u32 %v315, 16
  %v378 = vrot.slane %v376, 1
  %v379 = vor.u32 %v374, %v378
  %v381 = vshrl.u32 %v316, 16
  %v383 = vshll.u32 %v316, 16
  %v385 = vrot.slane %v383, 1
  %v386 = vor.u32 %v381, %v385
  %v388 = vshrl.u32 %v317, 16
  %v390 = vshll.u32 %v317, 16
  %v392 = vrot.slane %v390, 1
  %v393 = vor.u32 %v388, %v392
  %v395 = vshrl.u32 %v318, 16
  %v397 = vshll.u32 %v318, 16
  %v399 = vrot.slane %v397, 1
  %v400 = vor.u32 %v395, %v399
  %v402 = vshrl.u32 %v319, 16
  %v404 = vshll.u32 %v319, 16
  %v406 = vrot.slane %v404, 1
  %v407 = vor.u32 %v402, %v406
  %v409 = vshrl.u32 %v320, 16
  %v411 = vshll.u32 %v320, 16
  %v413 = vrot.slane %v411, 1
  %v414 = vor.u32 %v409, %v413
  %v416 = vshrl.u32 %v321, 16
  %v418 = vshll.u32 %v321, 16
  %v420 = vrot.slane %v418, 1
  %v421 = vor.u32 %v416, %v420
  %v423 = vshrl.u32 %v322, 16
  %v425 = vshll.u32 %v322, 16
  %v427 = vrot.slane %v425, 1
  %v428 = vor.u32 %v423, %v427
  %v430 = vshrl.u32 %v323, 16
  %v432 = vshll.u32 %v323, 16
  %v434 = vrot.slane %v432, 1
  %v435 = vor.u32 %v430, %v434
  %436 = vrot.lane.b32.xlu0 %v330, 8
  %v437 = vpop.permute.xlu0 %436
  %438 = vrot.lane.b32.xlu0 %v337, 8
  %v439 = vpop.permute.xlu0 %438
  %440 = vrot.lane.b32.xlu0 %v344, 8
  %v441 = vpop.permute.xlu0 %440
  %442 = vrot.lane.b32.xlu0 %v351, 8
  %v443 = vpop.permute.xlu0 %442
  %444 = vrot.lane.b32.xlu0 %v358, 8
  %v445 = vpop.permute.xlu0 %444
  %446 = vrot.lane.b32.xlu0 %v365, 8
  %v447 = vpop.permute.xlu0 %446
  %448 = vrot.lane.b32.xlu0 %v372, 8
  %v449 = vpop.permute.xlu0 %448
  %450 = vrot.lane.b32.xlu0 %v379, 8
  %v451 = vpop.permute.xlu0 %450
  %452 = vrot.lane.b32.xlu0 %v386, 8
  %v453 = vpop.permute.xlu0 %452
  %454 = vrot.lane.b32.xlu0 %v393, 8
  %v455 = vpop.permute.xlu0 %454
  %456 = vrot.lane.b32.xlu0 %v400, 8
  %v457 = vpop.permute.xlu0 %456
  %458 = vrot.lane.b32.xlu0 %v407, 8
  %v459 = vpop.permute.xlu0 %458
  %460 = vrot.lane.b32.xlu0 %v414, 8
  %v461 = vpop.permute.xlu0 %460
  %462 = vrot.lane.b32.xlu0 %v421, 8
  %v463 = vpop.permute.xlu0 %462
  %464 = vrot.lane.b32.xlu0 %v428, 8
  %v465 = vpop.permute.xlu0 %464
  %466 = vrot.lane.b32.xlu0 %v435, 8
  %v467 = vpop.permute.xlu0 %466
  %v484 = vunpack.c.l.b16 %v65
  %v485 = vunpack.c.l.b16 %v66
  %v486 = vunpack.c.l.b16 %v67
  %v487 = vunpack.c.l.b16 %v68
  %v488 = vunpack.c.l.b16 %v69
  %v489 = vunpack.c.l.b16 %v70
  %v490 = vunpack.c.l.b16 %v71
  %v491 = vunpack.c.l.b16 %v72
  %v492 = vunpack.c.l.b16 %v73
  %v493 = vunpack.c.l.b16 %v74
  %v494 = vunpack.c.l.b16 %v75
  %v495 = vunpack.c.l.b16 %v76
  %v496 = vunpack.c.l.b16 %v77
  %v497 = vunpack.c.l.b16 %v78
  %v498 = vunpack.c.l.b16 %v79
  %v499 = vunpack.c.l.b16 %v80
  %v500 = vpack.c.b16 %v484, %v484
  %v501 = vpack.c.b16 %v485, %v485
  %v502 = vpack.c.b16 %v486, %v486
  %v503 = vpack.c.b16 %v487, %v487
  %v504 = vpack.c.b16 %v488, %v488
  %v505 = vpack.c.b16 %v489, %v489
  %v506 = vpack.c.b16 %v490, %v490
  %v507 = vpack.c.b16 %v491, %v491
  %v508 = vpack.c.b16 %v492, %v492
  %v509 = vpack.c.b16 %v493, %v493
  %v510 = vpack.c.b16 %v494, %v494
  %v511 = vpack.c.b16 %v495, %v495
  %v512 = vpack.c.b16 %v496, %v496
  %v513 = vpack.c.b16 %v497, %v497
  %v514 = vpack.c.b16 %v498, %v498
  %v515 = vpack.c.b16 %v499, %v499
  %516 = vrot.lane.b32.xlu0 %v500, 12
  %v517 = vpop.permute.xlu0 %516
  %518 = vrot.lane.b32.xlu0 %v501, 12
  %v519 = vpop.permute.xlu0 %518
  %520 = vrot.lane.b32.xlu0 %v502, 12
  %v521 = vpop.permute.xlu0 %520
  %522 = vrot.lane.b32.xlu0 %v503, 12
  %v523 = vpop.permute.xlu0 %522
  %524 = vrot.lane.b32.xlu0 %v504, 12
  %v525 = vpop.permute.xlu0 %524
  %526 = vrot.lane.b32.xlu0 %v505, 12
  %v527 = vpop.permute.xlu0 %526
  %528 = vrot.lane.b32.xlu0 %v506, 12
  %v529 = vpop.permute.xlu0 %528
  %530 = vrot.lane.b32.xlu0 %v507, 12
  %v531 = vpop.permute.xlu0 %530
  %532 = vrot.lane.b32.xlu0 %v508, 12
  %v533 = vpop.permute.xlu0 %532
  %534 = vrot.lane.b32.xlu0 %v509, 12
  %v535 = vpop.permute.xlu0 %534
  %536 = vrot.lane.b32.xlu0 %v510, 12
  %v537 = vpop.permute.xlu0 %536
  %538 = vrot.lane.b32.xlu0 %v511, 12
  %v539 = vpop.permute.xlu0 %538
  %540 = vrot.lane.b32.xlu0 %v512, 12
  %v541 = vpop.permute.xlu0 %540
  %542 = vrot.lane.b32.xlu0 %v513, 12
  %v543 = vpop.permute.xlu0 %542
  %544 = vrot.lane.b32.xlu0 %v514, 12
  %v545 = vpop.permute.xlu0 %544
  %546 = vrot.lane.b32.xlu0 %v515, 12
  %v547 = vpop.permute.xlu0 %546
  %v564 = vunpack.c.l.b16 %v82
  %v565 = vunpack.c.l.b16 %v83
  %v566 = vunpack.c.l.b16 %v84
  %v567 = vunpack.c.l.b16 %v85
  %v568 = vunpack.c.l.b16 %v86
  %v569 = vunpack.c.l.b16 %v87
  %v570 = vunpack.c.l.b16 %v88
  %v571 = vunpack.c.l.b16 %v89
  %v572 = vunpack.c.l.b16 %v90
  %v573 = vunpack.c.l.b16 %v91
  %v574 = vunpack.c.l.b16 %v92
  %v575 = vunpack.c.l.b16 %v93
  %v576 = vunpack.c.l.b16 %v94
  %v577 = vunpack.c.l.b16 %v95
  %v578 = vunpack.c.l.b16 %v96
  %v579 = vunpack.c.l.b16 %v97
  %v580 = vpack.c.b16 %v564, %v564
  %v581 = vpack.c.b16 %v565, %v565
  %v582 = vpack.c.b16 %v566, %v566
  %v583 = vpack.c.b16 %v567, %v567
  %v584 = vpack.c.b16 %v568, %v568
  %v585 = vpack.c.b16 %v569, %v569
  %v586 = vpack.c.b16 %v570, %v570
  %v587 = vpack.c.b16 %v571, %v571
  %v588 = vpack.c.b16 %v572, %v572
  %v589 = vpack.c.b16 %v573, %v573
  %v590 = vpack.c.b16 %v574, %v574
  %v591 = vpack.c.b16 %v575, %v575
  %v592 = vpack.c.b16 %v576, %v576
  %v593 = vpack.c.b16 %v577, %v577
  %v594 = vpack.c.b16 %v578, %v578
  %v595 = vpack.c.b16 %v579, %v579
  %596 = vrot.lane.b32.xlu0 %v580, 16
  %v597 = vpop.permute.xlu0 %596
  %598 = vrot.lane.b32.xlu0 %v581, 16
  %v599 = vpop.permute.xlu0 %598
  %600 = vrot.lane.b32.xlu0 %v582, 16
  %v601 = vpop.permute.xlu0 %600
  %602 = vrot.lane.b32.xlu0 %v583, 16
  %v603 = vpop.permute.xlu0 %602
  %604 = vrot.lane.b32.xlu0 %v584, 16
  %v605 = vpop.permute.xlu0 %604
  %606 = vrot.lane.b32.xlu0 %v585, 16
  %v607 = vpop.permute.xlu0 %606
  %608 = vrot.lane.b32.xlu0 %v586, 16
  %v609 = vpop.permute.xlu0 %608
  %610 = vrot.lane.b32.xlu0 %v587, 16
  %v611 = vpop.permute.xlu0 %610
  %612 = vrot.lane.b32.xlu0 %v588, 16
  %v613 = vpop.permute.xlu0 %612
  %614 = vrot.lane.b32.xlu0 %v589, 16
  %v615 = vpop.permute.xlu0 %614
  %616 = vrot.lane.b32.xlu0 %v590, 16
  %v617 = vpop.permute.xlu0 %616
  %618 = vrot.lane.b32.xlu0 %v591, 16
  %v619 = vpop.permute.xlu0 %618
  %620 = vrot.lane.b32.xlu0 %v592, 16
  %v621 = vpop.permute.xlu0 %620
  %622 = vrot.lane.b32.xlu0 %v593, 16
  %v623 = vpop.permute.xlu0 %622
  %624 = vrot.lane.b32.xlu0 %v594, 16
  %v625 = vpop.permute.xlu0 %624
  %626 = vrot.lane.b32.xlu0 %v595, 16
  %v627 = vpop.permute.xlu0 %626
  %v644 = vunpack.c.l.b16 %v98
  %v645 = vunpack.c.l.b16 %v99
  %v646 = vunpack.c.l.b16 %v100
  %v647 = vunpack.c.l.b16 %v101
  %v648 = vunpack.c.l.b16 %v102
  %v649 = vunpack.c.l.b16 %v103
  %v650 = vunpack.c.l.b16 %v104
  %v651 = vunpack.c.l.b16 %v105
  %v652 = vunpack.c.l.b16 %v106
  %v653 = vunpack.c.l.b16 %v107
  %v654 = vunpack.c.l.b16 %v108
  %v655 = vunpack.c.l.b16 %v109
  %v656 = vunpack.c.l.b16 %v110
  %v657 = vunpack.c.l.b16 %v111
  %v658 = vunpack.c.l.b16 %v112
  %v659 = vunpack.c.l.b16 %v113
  %v660 = vpack.c.b16 %v644, %v484
  %v661 = vpack.c.b16 %v645, %v485
  %v662 = vpack.c.b16 %v646, %v486
  %v663 = vpack.c.b16 %v647, %v487
  %v664 = vpack.c.b16 %v648, %v488
  %v665 = vpack.c.b16 %v649, %v489
  %v666 = vpack.c.b16 %v650, %v490
  %v667 = vpack.c.b16 %v651, %v491
  %v668 = vpack.c.b16 %v652, %v492
  %v669 = vpack.c.b16 %v653, %v493
  %v670 = vpack.c.b16 %v654, %v494
  %v671 = vpack.c.b16 %v655, %v495
  %v672 = vpack.c.b16 %v656, %v496
  %v673 = vpack.c.b16 %v657, %v497
  %v674 = vpack.c.b16 %v658, %v498
  %v675 = vpack.c.b16 %v659, %v499
  %v677 = vshrl.u32 %v660, 16
  %v679 = vshll.u32 %v660, 16
  %v681 = vrot.slane %v679, 1
  %v682 = vor.u32 %v677, %v681
  %v684 = vshrl.u32 %v661, 16
  %v686 = vshll.u32 %v661, 16
  %v688 = vrot.slane %v686, 1
  %v689 = vor.u32 %v684, %v688
  %v691 = vshrl.u32 %v662, 16
  %v693 = vshll.u32 %v662, 16
  %v695 = vrot.slane %v693, 1
  %v696 = vor.u32 %v691, %v695
  %v698 = vshrl.u32 %v663, 16
  %v700 = vshll.u32 %v663, 16
  %v702 = vrot.slane %v700, 1
  %v703 = vor.u32 %v698, %v702
  %v705 = vshrl.u32 %v664, 16
  %v707 = vshll.u32 %v664, 16
  %v709 = vrot.slane %v707, 1
  %v710 = vor.u32 %v705, %v709
  %v712 = vshrl.u32 %v665, 16
  %v714 = vshll.u32 %v665, 16
  %v716 = vrot.slane %v714, 1
  %v717 = vor.u32 %v712, %v716
  %v719 = vshrl.u32 %v666, 16
  %v721 = vshll.u32 %v666, 16
  %v723 = vrot.slane %v721, 1
  %v724 = vor.u32 %v719, %v723
  %v726 = vshrl.u32 %v667, 16
  %v728 = vshll.u32 %v667, 16
  %v730 = vrot.slane %v728, 1
  %v731 = vor.u32 %v726, %v730
  %v733 = vshrl.u32 %v668, 16
  %v735 = vshll.u32 %v668, 16
  %v737 = vrot.slane %v735, 1
  %v738 = vor.u32 %v733, %v737
  %v740 = vshrl.u32 %v669, 16
  %v742 = vshll.u32 %v669, 16
  %v744 = vrot.slane %v742, 1
  %v745 = vor.u32 %v740, %v744
  %v747 = vshrl.u32 %v670, 16
  %v749 = vshll.u32 %v670, 16
  %v751 = vrot.slane %v749, 1
  %v752 = vor.u32 %v747, %v751
  %v754 = vshrl.u32 %v671, 16
  %v756 = vshll.u32 %v671, 16
  %v758 = vrot.slane %v756, 1
  %v759 = vor.u32 %v754, %v758
  %v761 = vshrl.u32 %v672, 16
  %v763 = vshll.u32 %v672, 16
  %v765 = vrot.slane %v763, 1
  %v766 = vor.u32 %v761, %v765
  %v768 = vshrl.u32 %v673, 16
  %v770 = vshll.u32 %v673, 16
  %v772 = vrot.slane %v770, 1
  %v773 = vor.u32 %v768, %v772
  %v775 = vshrl.u32 %v674, 16
  %v777 = vshll.u32 %v674, 16
  %v779 = vrot.slane %v777, 1
  %v780 = vor.u32 %v775, %v779
  %v782 = vshrl.u32 %v675, 16
  %v784 = vshll.u32 %v675, 16
  %v786 = vrot.slane %v784, 1
  %v787 = vor.u32 %v782, %v786
  %788 = vrot.lane.b32.xlu0 %v682, 20
  %v789 = vpop.permute.xlu0 %788
  %790 = vrot.lane.b32.xlu0 %v689, 20
  %v791 = vpop.permute.xlu0 %790
  %792 = vrot.lane.b32.xlu0 %v696, 20
  %v793 = vpop.permute.xlu0 %792
  %794 = vrot.lane.b32.xlu0 %v703, 20
  %v795 = vpop.permute.xlu0 %794
  %796 = vrot.lane.b32.xlu0 %v710, 20
  %v797 = vpop.permute.xlu0 %796
  %798 = vrot.lane.b32.xlu0 %v717, 20
  %v799 = vpop.permute.xlu0 %798
  %800 = vrot.lane.b32.xlu0 %v724, 20
  %v801 = vpop.permute.xlu0 %800
  %802 = vrot.lane.b32.xlu0 %v731, 20
  %v803 = vpop.permute.xlu0 %802
  %804 = vrot.lane.b32.xlu0 %v738, 20
  %v805 = vpop.permute.xlu0 %804
  %806 = vrot.lane.b32.xlu0 %v745, 20
  %v807 = vpop.permute.xlu0 %806
  %808 = vrot.lane.b32.xlu0 %v752, 20
  %v809 = vpop.permute.xlu0 %808
  %810 = vrot.lane.b32.xlu0 %v759, 20
  %v811 = vpop.permute.xlu0 %810
  %812 = vrot.lane.b32.xlu0 %v766, 20
  %v813 = vpop.permute.xlu0 %812
  %814 = vrot.lane.b32.xlu0 %v773, 20
  %v815 = vpop.permute.xlu0 %814
  %816 = vrot.lane.b32.xlu0 %v780, 20
  %v817 = vpop.permute.xlu0 %816
  %818 = vrot.lane.b32.xlu0 %v787, 20
  %v819 = vpop.permute.xlu0 %818
  %v836 = vunpack.c.l.b16 %v115
  %v837 = vunpack.c.l.b16 %v116
  %v838 = vunpack.c.l.b16 %v117
  %v839 = vunpack.c.l.b16 %v118
  %v840 = vunpack.c.l.b16 %v119
  %v841 = vunpack.c.l.b16 %v120
  %v842 = vunpack.c.l.b16 %v121
  %v843 = vunpack.c.l.b16 %v122
  %v844 = vunpack.c.l.b16 %v123
  %v845 = vunpack.c.l.b16 %v124
  %v846 = vunpack.c.l.b16 %v125
  %v847 = vunpack.c.l.b16 %v126
  %v848 = vunpack.c.l.b16 %v127
  %v849 = vunpack.c.l.b16 %v128
  %v850 = vunpack.c.l.b16 %v129
  %v851 = vunpack.c.l.b16 %v130
  %v852 = vpack.c.b16 %v836, %v836
  %v853 = vpack.c.b16 %v837, %v837
  %v854 = vpack.c.b16 %v838, %v838
  %v855 = vpack.c.b16 %v839, %v839
  %v856 = vpack.c.b16 %v840, %v840
  %v857 = vpack.c.b16 %v841, %v841
  %v858 = vpack.c.b16 %v842, %v842
  %v859 = vpack.c.b16 %v843, %v843
  %v860 = vpack.c.b16 %v844, %v844
  %v861 = vpack.c.b16 %v845, %v845
  %v862 = vpack.c.b16 %v846, %v846
  %v863 = vpack.c.b16 %v847, %v847
  %v864 = vpack.c.b16 %v848, %v848
  %v865 = vpack.c.b16 %v849, %v849
  %v866 = vpack.c.b16 %v850, %v850
  %v867 = vpack.c.b16 %v851, %v851
  %868 = vrot.lane.b32.xlu0 %v852, 24
  %v869 = vpop.permute.xlu0 %868
  %870 = vrot.lane.b32.xlu0 %v853, 24
  %v871 = vpop.permute.xlu0 %870
  %872 = vrot.lane.b32.xlu0 %v854, 24
  %v873 = vpop.permute.xlu0 %872
  %874 = vrot.lane.b32.xlu0 %v855, 24
  %v875 = vpop.permute.xlu0 %874
  %876 = vrot.lane.b32.xlu0 %v856, 24
  %v877 = vpop.permute.xlu0 %876
  %878 = vrot.lane.b32.xlu0 %v857, 24
  %v879 = vpop.permute.xlu0 %878
  %880 = vrot.lane.b32.xlu0 %v858, 24
  %v881 = vpop.permute.xlu0 %880
  %882 = vrot.lane.b32.xlu0 %v859, 24
  %v883 = vpop.permute.xlu0 %882
  %884 = vrot.lane.b32.xlu0 %v860, 24
  %v885 = vpop.permute.xlu0 %884
  %886 = vrot.lane.b32.xlu0 %v861, 24
  %v887 = vpop.permute.xlu0 %886
  %888 = vrot.lane.b32.xlu0 %v862, 24
  %v889 = vpop.permute.xlu0 %888
  %890 = vrot.lane.b32.xlu0 %v863, 24
  %v891 = vpop.permute.xlu0 %890
  %892 = vrot.lane.b32.xlu0 %v864, 24
  %v893 = vpop.permute.xlu0 %892
  %894 = vrot.lane.b32.xlu0 %v865, 24
  %v895 = vpop.permute.xlu0 %894
  %896 = vrot.lane.b32.xlu0 %v866, 24
  %v897 = vpop.permute.xlu0 %896
  %898 = vrot.lane.b32.xlu0 %v867, 24
  %v899 = vpop.permute.xlu0 %898
  %v916 = vunpack.c.l.b16 %v132
  %v917 = vunpack.c.l.b16 %v133
  %v918 = vunpack.c.l.b16 %v134
  %v919 = vunpack.c.l.b16 %v135
  %v920 = vunpack.c.l.b16 %v136
  %v921 = vunpack.c.l.b16 %v137
  %v922 = vunpack.c.l.b16 %v138
  %v923 = vunpack.c.l.b16 %v139
  %v924 = vunpack.c.l.b16 %v140
  %v925 = vunpack.c.l.b16 %v141
  %v926 = vunpack.c.l.b16 %v142
  %v927 = vunpack.c.l.b16 %v143
  %v928 = vunpack.c.l.b16 %v144
  %v929 = vunpack.c.l.b16 %v145
  %v930 = vunpack.c.l.b16 %v146
  %v931 = vunpack.c.l.b16 %v147
  %v932 = vpack.c.b16 %v916, %v916
  %v933 = vpack.c.b16 %v917, %v917
  %v934 = vpack.c.b16 %v918, %v918
  %v935 = vpack.c.b16 %v919, %v919
  %v936 = vpack.c.b16 %v920, %v920
  %v937 = vpack.c.b16 %v921, %v921
  %v938 = vpack.c.b16 %v922, %v922
  %v939 = vpack.c.b16 %v923, %v923
  %v940 = vpack.c.b16 %v924, %v924
  %v941 = vpack.c.b16 %v925, %v925
  %v942 = vpack.c.b16 %v926, %v926
  %v943 = vpack.c.b16 %v927, %v927
  %v944 = vpack.c.b16 %v928, %v928
  %v945 = vpack.c.b16 %v929, %v929
  %v946 = vpack.c.b16 %v930, %v930
  %v947 = vpack.c.b16 %v931, %v931
  %948 = vrot.lane.b32.xlu0 %v932, 28
  %v949 = vpop.permute.xlu0 %948
  %950 = vrot.lane.b32.xlu0 %v933, 28
  %v951 = vpop.permute.xlu0 %950
  %952 = vrot.lane.b32.xlu0 %v934, 28
  %v953 = vpop.permute.xlu0 %952
  %954 = vrot.lane.b32.xlu0 %v935, 28
  %v955 = vpop.permute.xlu0 %954
  %956 = vrot.lane.b32.xlu0 %v936, 28
  %v957 = vpop.permute.xlu0 %956
  %958 = vrot.lane.b32.xlu0 %v937, 28
  %v959 = vpop.permute.xlu0 %958
  %960 = vrot.lane.b32.xlu0 %v938, 28
  %v961 = vpop.permute.xlu0 %960
  %962 = vrot.lane.b32.xlu0 %v939, 28
  %v963 = vpop.permute.xlu0 %962
  %964 = vrot.lane.b32.xlu0 %v940, 28
  %v965 = vpop.permute.xlu0 %964
  %966 = vrot.lane.b32.xlu0 %v941, 28
  %v967 = vpop.permute.xlu0 %966
  %968 = vrot.lane.b32.xlu0 %v942, 28
  %v969 = vpop.permute.xlu0 %968
  %970 = vrot.lane.b32.xlu0 %v943, 28
  %v971 = vpop.permute.xlu0 %970
  %972 = vrot.lane.b32.xlu0 %v944, 28
  %v973 = vpop.permute.xlu0 %972
  %974 = vrot.lane.b32.xlu0 %v945, 28
  %v975 = vpop.permute.xlu0 %974
  %976 = vrot.lane.b32.xlu0 %v946, 28
  %v977 = vpop.permute.xlu0 %976
  %978 = vrot.lane.b32.xlu0 %v947, 28
  %v979 = vpop.permute.xlu0 %978
  %v996 = vunpack.c.l.b16 %v148
  %v997 = vunpack.c.l.b16 %v149
  %v998 = vunpack.c.l.b16 %v150
  %v999 = vunpack.c.l.b16 %v151
  %v1000 = vunpack.c.l.b16 %v152
  %v1001 = vunpack.c.l.b16 %v153
  %v1002 = vunpack.c.l.b16 %v154
  %v1003 = vunpack.c.l.b16 %v155
  %v1004 = vunpack.c.l.b16 %v156
  %v1005 = vunpack.c.l.b16 %v157
  %v1006 = vunpack.c.l.b16 %v158
  %v1007 = vunpack.c.l.b16 %v159
  %v1008 = vunpack.c.l.b16 %v160
  %v1009 = vunpack.c.l.b16 %v161
  %v1010 = vunpack.c.l.b16 %v162
  %v1011 = vunpack.c.l.b16 %v163
  %v1012 = vpack.c.b16 %v996, %v836
  %v1013 = vpack.c.b16 %v997, %v837
  %v1014 = vpack.c.b16 %v998, %v838
  %v1015 = vpack.c.b16 %v999, %v839
  %v1016 = vpack.c.b16 %v1000, %v840
  %v1017 = vpack.c.b16 %v1001, %v841
  %v1018 = vpack.c.b16 %v1002, %v842
  %v1019 = vpack.c.b16 %v1003, %v843
  %v1020 = vpack.c.b16 %v1004, %v844
  %v1021 = vpack.c.b16 %v1005, %v845
  %v1022 = vpack.c.b16 %v1006, %v846
  %v1023 = vpack.c.b16 %v1007, %v847
  %v1024 = vpack.c.b16 %v1008, %v848
  %v1025 = vpack.c.b16 %v1009, %v849
  %v1026 = vpack.c.b16 %v1010, %v850
  %v1027 = vpack.c.b16 %v1011, %v851
  %v1029 = vshrl.u32 %v1012, 16
  %v1031 = vshll.u32 %v1012, 16
  %v1033 = vrot.slane %v1031, 1
  %v1034 = vor.u32 %v1029, %v1033
  %v1036 = vshrl.u32 %v1013, 16
  %v1038 = vshll.u32 %v1013, 16
  %v1040 = vrot.slane %v1038, 1
  %v1041 = vor.u32 %v1036, %v1040
  %v1043 = vshrl.u32 %v1014, 16
  %v1045 = vshll.u32 %v1014, 16
  %v1047 = vrot.slane %v1045, 1
  %v1048 = vor.u32 %v1043, %v1047
  %v1050 = vshrl.u32 %v1015, 16
  %v1052 = vshll.u32 %v1015, 16
  %v1054 = vrot.slane %v1052, 1
  %v1055 = vor.u32 %v1050, %v1054
  %v1057 = vshrl.u32 %v1016, 16
  %v1059 = vshll.u32 %v1016, 16
  %v1061 = vrot.slane %v1059, 1
  %v1062 = vor.u32 %v1057, %v1061
  %v1064 = vshrl.u32 %v1017, 16
  %v1066 = vshll.u32 %v1017, 16
  %v1068 = vrot.slane %v1066, 1
  %v1069 = vor.u32 %v1064, %v1068
  %v1071 = vshrl.u32 %v1018, 16
  %v1073 = vshll.u32 %v1018, 16
  %v1075 = vrot.slane %v1073, 1
  %v1076 = vor.u32 %v1071, %v1075
  %v1078 = vshrl.u32 %v1019, 16
  %v1080 = vshll.u32 %v1019, 16
  %v1082 = vrot.slane %v1080, 1
  %v1083 = vor.u32 %v1078, %v1082
  %v1085 = vshrl.u32 %v1020, 16
  %v1087 = vshll.u32 %v1020, 16
  %v1089 = vrot.slane %v1087, 1
  %v1090 = vor.u32 %v1085, %v1089
  %v1092 = vshrl.u32 %v1021, 16
  %v1094 = vshll.u32 %v1021, 16
  %v1096 = vrot.slane %v1094, 1
  %v1097 = vor.u32 %v1092, %v1096
  %v1099 = vshrl.u32 %v1022, 16
  %v1101 = vshll.u32 %v1022, 16
  %v1103 = vrot.slane %v1101, 1
  %v1104 = vor.u32 %v1099, %v1103
  %v1106 = vshrl.u32 %v1023, 16
  %v1108 = vshll.u32 %v1023, 16
  %v1110 = vrot.slane %v1108, 1
  %v1111 = vor.u32 %v1106, %v1110
  %v1113 = vshrl.u32 %v1024, 16
  %v1115 = vshll.u32 %v1024, 16
  %v1117 = vrot.slane %v1115, 1
  %v1118 = vor.u32 %v1113, %v1117
  %v1120 = vshrl.u32 %v1025, 16
  %v1122 = vshll.u32 %v1025, 16
  %v1124 = vrot.slane %v1122, 1
  %v1125 = vor.u32 %v1120, %v1124
  %v1127 = vshrl.u32 %v1026, 16
  %v1129 = vshll.u32 %v1026, 16
  %v1131 = vrot.slane %v1129, 1
  %v1132 = vor.u32 %v1127, %v1131
  %v1134 = vshrl.u32 %v1027, 16
  %v1136 = vshll.u32 %v1027, 16
  %v1138 = vrot.slane %v1136, 1
  %v1139 = vor.u32 %v1134, %v1138
  %1140 = vrot.lane.b32.xlu0 %v1034, 32
  %v1141 = vpop.permute.xlu0 %1140
  %1142 = vrot.lane.b32.xlu0 %v1041, 32
  %v1143 = vpop.permute.xlu0 %1142
  %1144 = vrot.lane.b32.xlu0 %v1048, 32
  %v1145 = vpop.permute.xlu0 %1144
  %1146 = vrot.lane.b32.xlu0 %v1055, 32
  %v1147 = vpop.permute.xlu0 %1146
  %1148 = vrot.lane.b32.xlu0 %v1062, 32
  %v1149 = vpop.permute.xlu0 %1148
  %1150 = vrot.lane.b32.xlu0 %v1069, 32
  %v1151 = vpop.permute.xlu0 %1150
  %1152 = vrot.lane.b32.xlu0 %v1076, 32
  %v1153 = vpop.permute.xlu0 %1152
  %1154 = vrot.lane.b32.xlu0 %v1083, 32
  %v1155 = vpop.permute.xlu0 %1154
  %1156 = vrot.lane.b32.xlu0 %v1090, 32
  %v1157 = vpop.permute.xlu0 %1156
  %1158 = vrot.lane.b32.xlu0 %v1097, 32
  %v1159 = vpop.permute.xlu0 %1158
  %1160 = vrot.lane.b32.xlu0 %v1104, 32
  %v1161 = vpop.permute.xlu0 %1160
  %1162 = vrot.lane.b32.xlu0 %v1111, 32
  %v1163 = vpop.permute.xlu0 %1162
  %1164 = vrot.lane.b32.xlu0 %v1118, 32
  %v1165 = vpop.permute.xlu0 %1164
  %1166 = vrot.lane.b32.xlu0 %v1125, 32
  %v1167 = vpop.permute.xlu0 %1166
  %1168 = vrot.lane.b32.xlu0 %v1132, 32
  %v1169 = vpop.permute.xlu0 %1168
  %1170 = vrot.lane.b32.xlu0 %v1139, 32
  %v1171 = vpop.permute.xlu0 %1170
  %vm1172 = vcmask 31744
  %v1175 = vsel %vm1172, %v15, %v213
  %v1178 = vsel %vm1172, %v16, %v215
  %v1181 = vsel %vm1172, %v17, %v217
  %v1184 = vsel %vm1172, %v18, %v219
  %v1187 = vsel %vm1172, %v19, %v221
  %v1190 = vsel %vm1172, %v20, %v223
  %v1193 = vsel %vm1172, %v21, %v225
  %v1196 = vsel %vm1172, %v22, %v227
  %v1199 = vsel %vm1172, %v23, %v229
  %v1202 = vsel %vm1172, %v24, %v231
  %v1205 = vsel %vm1172, %v25, %v233
  %v1208 = vsel %vm1172, %v26, %v235
  %v1211 = vsel %vm1172, %v27, %v237
  %v1214 = vsel %vm1172, %v28, %v239
  %v1217 = vsel %vm1172, %v29, %v241
  %v1220 = vsel %vm1172, %v30, %v243
  %vm1221 = vcmask 64512
  %v1223 = vsel %vm1221, %v1175, %v437
  %v1225 = vsel %vm1221, %v1178, %v439
  %v1227 = vsel %vm1221, %v1181, %v441
  %v1229 = vsel %vm1221, %v1184, %v443
  %v1231 = vsel %vm1221, %v1187, %v445
  %v1233 = vsel %vm1221, %v1190, %v447
  %v1235 = vsel %vm1221, %v1193, %v449
  %v1237 = vsel %vm1221, %v1196, %v451
  %v1239 = vsel %vm1221, %v1199, %v453
  %v1241 = vsel %vm1221, %v1202, %v455
  %v1243 = vsel %vm1221, %v1205, %v457
  %v1245 = vsel %vm1221, %v1208, %v459
  %v1247 = vsel %vm1221, %v1211, %v461
  %v1249 = vsel %vm1221, %v1214, %v463
  %v1251 = vsel %vm1221, %v1217, %v465
  %v1253 = vsel %vm1221, %v1220, %v467
  %vm1254 = vcmask 97280
  %v1256 = vsel %vm1254, %v1223, %v517
  %v1258 = vsel %vm1254, %v1225, %v519
  %v1260 = vsel %vm1254, %v1227, %v521
  %v1262 = vsel %vm1254, %v1229, %v523
  %v1264 = vsel %vm1254, %v1231, %v525
  %v1266 = vsel %vm1254, %v1233, %v527
  %v1268 = vsel %vm1254, %v1235, %v529
  %v1270 = vsel %vm1254, %v1237, %v531
  %v1272 = vsel %vm1254, %v1239, %v533
  %v1274 = vsel %vm1254, %v1241, %v535
  %v1276 = vsel %vm1254, %v1243, %v537
  %v1278 = vsel %vm1254, %v1245, %v539
  %v1280 = vsel %vm1254, %v1247, %v541
  %v1282 = vsel %vm1254, %v1249, %v543
  %v1284 = vsel %vm1254, %v1251, %v545
  %v1286 = vsel %vm1254, %v1253, %v547
  %vm1287 = vcmask 130048
  %v1289 = vsel %vm1287, %v1256, %v597
  %v1291 = vsel %vm1287, %v1258, %v599
  %v1293 = vsel %vm1287, %v1260, %v601
  %v1295 = vsel %vm1287, %v1262, %v603
  %v1297 = vsel %vm1287, %v1264, %v605
  %v1299 = vsel %vm1287, %v1266, %v607
  %v1301 = vsel %vm1287, %v1268, %v609
  %v1303 = vsel %vm1287, %v1270, %v611
  %v1305 = vsel %vm1287, %v1272, %v613
  %v1307 = vsel %vm1287, %v1274, %v615
  %v1309 = vsel %vm1287, %v1276, %v617
  %v1311 = vsel %vm1287, %v1278, %v619
  %v1313 = vsel %vm1287, %v1280, %v621
  %v1315 = vsel %vm1287, %v1282, %v623
  %v1317 = vsel %vm1287, %v1284, %v625
  %v1319 = vsel %vm1287, %v1286, %v627
  %vm1320 = vcmask 162816
  %v1322 = vsel %vm1320, %v1289, %v789
  %v1324 = vsel %vm1320, %v1291, %v791
  %v1326 = vsel %vm1320, %v1293, %v793
  %v1328 = vsel %vm1320, %v1295, %v795
  %v1330 = vsel %vm1320, %v1297, %v797
  %v1332 = vsel %vm1320, %v1299, %v799
  %v1334 = vsel %vm1320, %v1301, %v801
  %v1336 = vsel %vm1320, %v1303, %v803
  %v1338 = vsel %vm1320, %v1305, %v805
  %v1340 = vsel %vm1320, %v1307, %v807
  %v1342 = vsel %vm1320, %v1309, %v809
  %v1344 = vsel %vm1320, %v1311, %v811
  %v1346 = vsel %vm1320, %v1313, %v813
  %v1348 = vsel %vm1320, %v1315, %v815
  %v1350 = vsel %vm1320, %v1317, %v817
  %v1352 = vsel %vm1320, %v1319, %v819
  %vm1353 = vcmask 195584
  %v1355 = vsel %vm1353, %v1322, %v869
  %v1357 = vsel %vm1353, %v1324, %v871
  %v1359 = vsel %vm1353, %v1326, %v873
  %v1361 = vsel %vm1353, %v1328, %v875
  %v1363 = vsel %vm1353, %v1330, %v877
  %v1365 = vsel %vm1353, %v1332, %v879
  %v1367 = vsel %vm1353, %v1334, %v881
  %v1369 = vsel %vm1353, %v1336, %v883
  %v1371 = vsel %vm1353, %v1338, %v885
  %v1373 = vsel %vm1353, %v1340, %v887
  %v1375 = vsel %vm1353, %v1342, %v889
  %v1377 = vsel %vm1353, %v1344, %v891
  %v1379 = vsel %vm1353, %v1346, %v893
  %v1381 = vsel %vm1353, %v1348, %v895
  %v1383 = vsel %vm1353, %v1350, %v897
  %v1385 = vsel %vm1353, %v1352, %v899
  %vm1386 = vcmask 228352
  %v1388 = vsel %vm1386, %v1355, %v949
  %v1390 = vsel %vm1386, %v1357, %v951
  %v1392 = vsel %vm1386, %v1359, %v953
  %v1394 = vsel %vm1386, %v1361, %v955
  %v1396 = vsel %vm1386, %v1363, %v957
  %v1398 = vsel %vm1386, %v1365, %v959
  %v1400 = vsel %vm1386, %v1367, %v961
  %v1402 = vsel %vm1386, %v1369, %v963
  %v1404 = vsel %vm1386, %v1371, %v965
  %v1406 = vsel %vm1386, %v1373, %v967
  %v1408 = vsel %vm1386, %v1375, %v969
  %v1410 = vsel %vm1386, %v1377, %v971
  %v1412 = vsel %vm1386, %v1379, %v973
  %v1414 = vsel %vm1386, %v1381, %v975
  %v1416 = vsel %vm1386, %v1383, %v977
  %v1418 = vsel %vm1386, %v1385, %v979
  %vm1419 = vcmask 261120
  %v1421 = vsel %vm1419, %v1388, %v1141
  %v1423 = vsel %vm1419, %v1390, %v1143
  %v1425 = vsel %vm1419, %v1392, %v1145
  %v1427 = vsel %vm1419, %v1394, %v1147
  %v1429 = vsel %vm1419, %v1396, %v1149
  %v1431 = vsel %vm1419, %v1398, %v1151
  %v1433 = vsel %vm1419, %v1400, %v1153
  %v1435 = vsel %vm1419, %v1402, %v1155
  %v1437 = vsel %vm1419, %v1404, %v1157
  %v1439 = vsel %vm1419, %v1406, %v1159
  %v1441 = vsel %vm1419, %v1408, %v1161
  %v1443 = vsel %vm1419, %v1410, %v1163
  %v1445 = vsel %vm1419, %v1412, %v1165
  %v1447 = vsel %vm1419, %v1414, %v1167
  %v1449 = vsel %vm1419, %v1416, %v1169
  %v1451 = vsel %vm1419, %v1418, %v1171
  %v1452 = vld [vmem:[%s1] sm:$0xf]
  %v1453 = vld [vmem:[%s1 + $0x4] sm:$0xf]
  %v1454 = vld [vmem:[%s1 + $0x8] sm:$0xf]
  %v1455 = vld [vmem:[%s1 + $0xc] sm:$0xf]
  %v1456 = vld [vmem:[%s1 + $0x10] sm:$0x3]
  %v1457 = vld [vmem:[%s2] sm:$0x1]
  %v1459 = vlaneseq
  %v1460 = vshrl.u32 %v1459, 7
  %v1461 = vsub.s32 0, %v1460
  %v1462 = vrot.slane %v1457, %v1461
  %v1480 = vunpack.c.l.b16 %v1421
  %v1481 = vunpack.c.l.b16 %v1423
  %v1482 = vunpack.c.l.b16 %v1425
  %v1483 = vunpack.c.l.b16 %v1427
  %v1484 = vunpack.c.l.b16 %v1429
  %v1485 = vunpack.c.l.b16 %v1431
  %v1486 = vunpack.c.l.b16 %v1433
  %v1487 = vunpack.c.l.b16 %v1435
  %v1488 = vunpack.c.l.b16 %v1437
  %v1489 = vunpack.c.l.b16 %v1439
  %v1490 = vunpack.c.l.b16 %v1441
  %v1491 = vunpack.c.l.b16 %v1443
  %v1492 = vunpack.c.l.b16 %v1445
  %v1493 = vunpack.c.l.b16 %v1447
  %v1494 = vunpack.c.l.b16 %v1449
  %v1495 = vunpack.c.l.b16 %v1451
  %v1496 = vpack.c.b16 %v1481, %v1480
  %v1497 = vpack.c.b16 %v1483, %v1482
  %v1498 = vpack.c.b16 %v1485, %v1484
  %v1499 = vpack.c.b16 %v1487, %v1486
  %v1500 = vpack.c.b16 %v1489, %v1488
  %v1501 = vpack.c.b16 %v1491, %v1490
  %v1502 = vpack.c.b16 %v1493, %v1492
  %v1503 = vpack.c.b16 %v1495, %v1494
  %v1509 = vunpack.c.l.b16 %v1452
  %v1510 = vunpack.c.l.b16 %v1453
  %v1511 = vunpack.c.l.b16 %v1454
  %v1512 = vunpack.c.l.b16 %v1455
  %v1513 = vunpack.c.l.b16 %v1456
  %v1514 = vpack.c.b16 %v1510, %v1509
  %v1515 = vpack.c.b16 %v1512, %v1511
  %v1516 = vpack.c.b16 %v1513, %v1513
  %vm1519 = vcmask 293888
  %v1521 = vsel %vm1519, %v1496, 0
  %v1524 = vsel %vm1519, %v1497, 0
  %v1527 = vsel %vm1519, %v1498, 0
  %v1530 = vsel %vm1519, %v1499, 0
  %v1533 = vsel %vm1519, %v1500, 0
  %v1536 = vsel %vm1519, %v1501, 0
  %v1539 = vsel %vm1519, %v1502, 0
  %v1542 = vsel %vm1519, %v1503, 0
  %vm1544 = vcmask 1041408
  %v1546 = vsel %vm1544, %v1516, 0
  %1548 = vmatprep.subr.bf16.mxu0 0
  %1549 = vmatpush1.bf16.msra.mxu0 %v1514
  %1550 = vmatprep.subr.bf16.mxu0 0
  %1551 = vmatpush1.bf16.msra.mxu0 %v1515
  %1552 = vmatprep.subr.bf16.mxu0 0
  %1553 = vmatpush1.bf16.msra.mxu0 %v1546
  %1554 = vmatprep.subr.bf16.mxu0 0
  %1555 = vmatpush1.bf16.msra.mxu0 0
  %1556 = vmatprep.subr.bf16.mxu0 0
  %1557 = vmatpush1.bf16.msra.mxu0 0
  %1558 = vmatprep.subr.bf16.mxu0 0
  %1559 = vmatpush1.bf16.msra.mxu0 0
  %1560 = vmatprep.subr.bf16.mxu0 0
  %1561 = vmatpush1.bf16.msra.mxu0 0
  %1562 = vmatprep.subr.bf16.mxu0 0
  %1563 = vmatpush1.bf16.msra.mxu0 0
  %1564 = vmatprep.subr.bf16.mxu0 0
  %1565 = vmatpush1.bf16.msra.mxu0 0
  %1566 = vmatprep.subr.bf16.mxu0 0
  %1567 = vmatpush1.bf16.msra.mxu0 0
  %1568 = vmatprep.subr.bf16.mxu0 0
  %1569 = vmatpush1.bf16.msra.mxu0 0
  %1570 = vmatprep.subr.bf16.mxu0 0
  %1571 = vmatpush1.bf16.msra.mxu0 0
  %1572 = vmatprep.subr.bf16.mxu0 0
  %1573 = vmatpush1.bf16.msra.mxu0 0
  %1574 = vmatprep.subr.bf16.mxu0 0
  %1575 = vmatpush1.bf16.msra.mxu0 0
  %1576 = vmatprep.subr.bf16.mxu0 0
  %1577 = vmatpush1.bf16.msra.mxu0 0
  %1578 = vmatprep.subr.bf16.mxu0 0
  %1579 = vmatpush1.bf16.msra.mxu0 0
  %1580 = vmatprep.mubr.bf16.mxu0 0
  %1581 = vmatmul.mubr.bf16.gmra.mrb[0].mxu0 %v1521
  %v1582 = vpop.f32.mrb[0].mxu0
  %v1583 = vadd.f32 %v1462, %v1582
  %v1584 = vpop.f32.mrb[0].mxu0
  %v1585 = vpop.f32.mrb[0].mxu0
  %v1586 = vadd.f32 %v1462, %v1585
  %v1587 = vpop.f32.mrb[0].mxu0
  %1588 = vmatprep.mubr.bf16.mxu0 0
  %1589 = vmatmul.mubr.bf16.gmra.mrb[0].mxu0 %v1524
  %v1590 = vpop.f32.mrb[0].mxu0
  %v1591 = vadd.f32 %v1462, %v1590
  %v1592 = vpop.f32.mrb[0].mxu0
  %v1593 = vpop.f32.mrb[0].mxu0
  %v1594 = vadd.f32 %v1462, %v1593
  %v1595 = vpop.f32.mrb[0].mxu0
  %1596 = vmatprep.mubr.bf16.mxu0 0
  %1597 = vmatmul.mubr.bf16.gmra.mrb[0].mxu0 %v1527
  %v1598 = vpop.f32.mrb[0].mxu0
  %v1599 = vadd.f32 %v1462, %v1598
  %v1600 = vpop.f32.mrb[0].mxu0
  %v1601 = vpop.f32.mrb[0].mxu0
  %v1602 = vadd.f32 %v1462, %v1601
  %v1603 = vpop.f32.mrb[0].mxu0
  %1604 = vmatprep.mubr.bf16.mxu0 0
  %1605 = vmatmul.mubr.bf16.gmra.mrb[0].mxu0 %v1530
  %v1606 = vpop.f32.mrb[0].mxu0
  %v1607 = vadd.f32 %v1462, %v1606
  %v1608 = vpop.f32.mrb[0].mxu0
  %v1609 = vpop.f32.mrb[0].mxu0
  %v1610 = vadd.f32 %v1462, %v1609
  %v1611 = vpop.f32.mrb[0].mxu0
  %1612 = vmatprep.mubr.bf16.mxu0 0
  %1613 = vmatmul.mubr.bf16.gmra.mrb[0].mxu0 %v1533
  %v1614 = vpop.f32.mrb[0].mxu0
  %v1615 = vadd.f32 %v1462, %v1614
  %v1616 = vpop.f32.mrb[0].mxu0
  %v1617 = vpop.f32.mrb[0].mxu0
  %v1618 = vadd.f32 %v1462, %v1617
  %v1619 = vpop.f32.mrb[0].mxu0
  %1620 = vmatprep.mubr.bf16.mxu0 0
  %1621 = vmatmul.mubr.bf16.gmra.mrb[0].mxu0 %v1536
  %v1622 = vpop.f32.mrb[0].mxu0
  %v1623 = vadd.f32 %v1462, %v1622
  %v1624 = vpop.f32.mrb[0].mxu0
  %v1625 = vpop.f32.mrb[0].mxu0
  %v1626 = vadd.f32 %v1462, %v1625
  %v1627 = vpop.f32.mrb[0].mxu0
  %1628 = vmatprep.mubr.bf16.mxu0 0
  %1629 = vmatmul.mubr.bf16.gmra.mrb[0].mxu0 %v1539
  %v1630 = vpop.f32.mrb[0].mxu0
  %v1631 = vadd.f32 %v1462, %v1630
  %v1632 = vpop.f32.mrb[0].mxu0
  %v1633 = vpop.f32.mrb[0].mxu0
  %v1634 = vadd.f32 %v1462, %v1633
  %v1635 = vpop.f32.mrb[0].mxu0
  %1636 = vmatprep.mubr.bf16.mxu0 0
  %1637 = vmatmul.mubr.bf16.gmra.mrb[0].mxu0 %v1542
  %v1638 = vpop.f32.mrb[0].mxu0
  %v1639 = vadd.f32 %v1462, %v1638
  %v1640 = vpop.f32.mrb[0].mxu0
  %v1641 = vpop.f32.mrb[0].mxu0
  %v1642 = vadd.f32 %v1462, %v1641
  %v1643 = vpop.f32.mrb[0].mxu0
  %1644 = vdwg.mxu0
  %v1661 = vrot.slane %v1586, 7
  %vm1662 = vcmask 1041409
  %v1663 = vsel %vm1662, %v1661, %v1583
  %v1664 = vrot.slane %v1591, 6
  %vm1665 = vcmask 1042434
  %v1666 = vsel %vm1665, %v1664, %v1663
  %v1667 = vrot.slane %v1594, 5
  %vm1668 = vcmask 1043459
  %v1669 = vsel %vm1668, %v1667, %v1666
  %v1670 = vrot.slane %v1599, 4
  %vm1671 = vcmask 1044484
  %v1672 = vsel %vm1671, %v1670, %v1669
  %v1673 = vrot.slane %v1602, 3
  %vm1674 = vcmask 1045509
  %v1675 = vsel %vm1674, %v1673, %v1672
  %v1676 = vrot.slane %v1607, 2
  %vm1677 = vcmask 1046534
  %v1678 = vsel %vm1677, %v1676, %v1675
  %v1679 = vrot.slane %v1610, 1
  %vm1680 = vcmask 1047559
  %v1681 = vsel %vm1680, %v1679, %v1678
  %v1682 = vrot.slane %v1618, 7
  %v1683 = vsel %vm1662, %v1682, %v1615
  %v1684 = vrot.slane %v1623, 6
  %v1685 = vsel %vm1665, %v1684, %v1683
  %v1686 = vrot.slane %v1626, 5
  %v1687 = vsel %vm1668, %v1686, %v1685
  %v1688 = vrot.slane %v1631, 4
  %v1689 = vsel %vm1671, %v1688, %v1687
  %v1690 = vrot.slane %v1634, 3
  %v1691 = vsel %vm1674, %v1690, %v1689
  %v1692 = vrot.slane %v1639, 2
  %v1693 = vsel %vm1677, %v1692, %v1691
  %v1694 = vrot.slane %v1642, 1
  %v1695 = vsel %vm1680, %v1694, %v1693
  %v1698 = vrot.slane %v1583, 1
  %v1699 = vsel %vm1662, %v1586, %v1698
  %v1700 = vrot.slane %v1591, 7
  %v1701 = vsel %vm1665, %v1700, %v1699
  %v1702 = vrot.slane %v1594, 6
  %v1703 = vsel %vm1668, %v1702, %v1701
  %v1704 = vrot.slane %v1599, 5
  %v1705 = vsel %vm1671, %v1704, %v1703
  %v1706 = vrot.slane %v1602, 4
  %v1707 = vsel %vm1674, %v1706, %v1705
  %v1708 = vrot.slane %v1607, 3
  %v1709 = vsel %vm1677, %v1708, %v1707
  %v1710 = vrot.slane %v1610, 2
  %v1711 = vsel %vm1680, %v1710, %v1709
  %v1712 = vrot.slane %v1615, 1
  %v1713 = vsel %vm1662, %v1618, %v1712
  %v1714 = vrot.slane %v1623, 7
  %v1715 = vsel %vm1665, %v1714, %v1713
  %v1716 = vrot.slane %v1626, 6
  %v1717 = vsel %vm1668, %v1716, %v1715
  %v1718 = vrot.slane %v1631, 5
  %v1719 = vsel %vm1671, %v1718, %v1717
  %v1720 = vrot.slane %v1634, 4
  %v1721 = vsel %vm1674, %v1720, %v1719
  %v1722 = vrot.slane %v1639, 3
  %v1723 = vsel %vm1677, %v1722, %v1721
  %v1724 = vrot.slane %v1642, 2
  %v1725 = vsel %vm1680, %v1724, %v1723
  %1726 = vrot.lane.b32.xlu0 %v1711, 4
  %v1727 = vpop.permute.xlu0 %1726
  %1728 = vrot.lane.b32.xlu0 %v1725, 4
  %v1729 = vpop.permute.xlu0 %1728
  %v1732 = vrot.slane %v1583, 2
  %v1733 = vrot.slane %v1586, 1
  %v1734 = vsel %vm1662, %v1733, %v1732
  %v1735 = vsel %vm1665, %v1591, %v1734
  %v1736 = vrot.slane %v1594, 7
  %v1737 = vsel %vm1668, %v1736, %v1735
  %v1738 = vrot.slane %v1599, 6
  %v1739 = vsel %vm1671, %v1738, %v1737
  %v1740 = vrot.slane %v1602, 5
  %v1741 = vsel %vm1674, %v1740, %v1739
  %v1742 = vrot.slane %v1607, 4
  %v1743 = vsel %vm1677, %v1742, %v1741
  %v1744 = vrot.slane %v1610, 3
  %v1745 = vsel %vm1680, %v1744, %v1743
  %v1746 = vrot.slane %v1615, 2
  %v1747 = vrot.slane %v1618, 1
  %v1748 = vsel %vm1662, %v1747, %v1746
  %v1749 = vsel %vm1665, %v1623, %v1748
  %v1750 = vrot.slane %v1626, 7
  %v1751 = vsel %vm1668, %v1750, %v1749
  %v1752 = vrot.slane %v1631, 6
  %v1753 = vsel %vm1671, %v1752, %v1751
  %v1754 = vrot.slane %v1634, 5
  %v1755 = vsel %vm1674, %v1754, %v1753
  %v1756 = vrot.slane %v1639, 4
  %v1757 = vsel %vm1677, %v1756, %v1755
  %v1758 = vrot.slane %v1642, 3
  %v1759 = vsel %vm1680, %v1758, %v1757
  %1760 = vrot.lane.b32.xlu0 %v1745, 8
  %v1761 = vpop.permute.xlu0 %1760
  %1762 = vrot.lane.b32.xlu0 %v1759, 8
  %v1763 = vpop.permute.xlu0 %1762
  %v1766 = vrot.slane %v1583, 3
  %v1767 = vrot.slane %v1586, 2
  %v1768 = vsel %vm1662, %v1767, %v1766
  %v1769 = vrot.slane %v1591, 1
  %v1770 = vsel %vm1665, %v1769, %v1768
  %v1771 = vsel %vm1668, %v1594, %v1770
  %v1772 = vrot.slane %v1599, 7
  %v1773 = vsel %vm1671, %v1772, %v1771
  %v1774 = vrot.slane %v1602, 6
  %v1775 = vsel %vm1674, %v1774, %v1773
  %v1776 = vrot.slane %v1607, 5
  %v1777 = vsel %vm1677, %v1776, %v1775
  %v1778 = vrot.slane %v1610, 4
  %v1779 = vsel %vm1680, %v1778, %v1777
  %v1780 = vrot.slane %v1615, 3
  %v1781 = vrot.slane %v1618, 2
  %v1782 = vsel %vm1662, %v1781, %v1780
  %v1783 = vrot.slane %v1623, 1
  %v1784 = vsel %vm1665, %v1783, %v1782
  %v1785 = vsel %vm1668, %v1626, %v1784
  %v1786 = vrot.slane %v1631, 7
  %v1787 = vsel %vm1671, %v1786, %v1785
  %v1788 = vrot.slane %v1634, 6
  %v1789 = vsel %vm1674, %v1788, %v1787
  %v1790 = vrot.slane %v1639, 5
  %v1791 = vsel %vm1677, %v1790, %v1789
  %v1792 = vrot.slane %v1642, 4
  %v1793 = vsel %vm1680, %v1792, %v1791
  %1794 = vrot.lane.b32.xlu0 %v1779, 12
  %v1795 = vpop.permute.xlu0 %1794
  %1796 = vrot.lane.b32.xlu0 %v1793, 12
  %v1797 = vpop.permute.xlu0 %1796
  %v1800 = vrot.slane %v1583, 4
  %v1801 = vrot.slane %v1586, 3
  %v1802 = vsel %vm1662, %v1801, %v1800
  %v1803 = vrot.slane %v1591, 2
  %v1804 = vsel %vm1665, %v1803, %v1802
  %v1805 = vrot.slane %v1594, 1
  %v1806 = vsel %vm1668, %v1805, %v1804
  %v1807 = vsel %vm1671, %v1599, %v1806
  %v1808 = vrot.slane %v1602, 7
  %v1809 = vsel %vm1674, %v1808, %v1807
  %v1810 = vrot.slane %v1607, 6
  %v1811 = vsel %vm1677, %v1810, %v1809
  %v1812 = vrot.slane %v1610, 5
  %v1813 = vsel %vm1680, %v1812, %v1811
  %v1814 = vrot.slane %v1615, 4
  %v1815 = vrot.slane %v1618, 3
  %v1816 = vsel %vm1662, %v1815, %v1814
  %v1817 = vrot.slane %v1623, 2
  %v1818 = vsel %vm1665, %v1817, %v1816
  %v1819 = vrot.slane %v1626, 1
  %v1820 = vsel %vm1668, %v1819, %v1818
  %v1821 = vsel %vm1671, %v1631, %v1820
  %v1822 = vrot.slane %v1634, 7
  %v1823 = vsel %vm1674, %v1822, %v1821
  %v1824 = vrot.slane %v1639, 6
  %v1825 = vsel %vm1677, %v1824, %v1823
  %v1826 = vrot.slane %v1642, 5
  %v1827 = vsel %vm1680, %v1826, %v1825
  %1828 = vrot.lane.b32.xlu0 %v1813, 16
  %v1829 = vpop.permute.xlu0 %1828
  %1830 = vrot.lane.b32.xlu0 %v1827, 16
  %v1831 = vpop.permute.xlu0 %1830
  %v1834 = vrot.slane %v1583, 5
  %v1835 = vrot.slane %v1586, 4
  %v1836 = vsel %vm1662, %v1835, %v1834
  %v1837 = vrot.slane %v1591, 3
  %v1838 = vsel %vm1665, %v1837, %v1836
  %v1839 = vrot.slane %v1594, 2
  %v1840 = vsel %vm1668, %v1839, %v1838
  %v1841 = vrot.slane %v1599, 1
  %v1842 = vsel %vm1671, %v1841, %v1840
  %v1843 = vsel %vm1674, %v1602, %v1842
  %v1844 = vrot.slane %v1607, 7
  %v1845 = vsel %vm1677, %v1844, %v1843
  %v1846 = vrot.slane %v1610, 6
  %v1847 = vsel %vm1680, %v1846, %v1845
  %v1848 = vrot.slane %v1615, 5
  %v1849 = vrot.slane %v1618, 4
  %v1850 = vsel %vm1662, %v1849, %v1848
  %v1851 = vrot.slane %v1623, 3
  %v1852 = vsel %vm1665, %v1851, %v1850
  %v1853 = vrot.slane %v1626, 2
  %v1854 = vsel %vm1668, %v1853, %v1852
  %v1855 = vrot.slane %v1631, 1
  %v1856 = vsel %vm1671, %v1855, %v1854
  %v1857 = vsel %vm1674, %v1634, %v1856
  %v1858 = vrot.slane %v1639, 7
  %v1859 = vsel %vm1677, %v1858, %v1857
  %v1860 = vrot.slane %v1642, 6
  %v1861 = vsel %vm1680, %v1860, %v1859
  %1862 = vrot.lane.b32.xlu0 %v1847, 20
  %v1863 = vpop.permute.xlu0 %1862
  %1864 = vrot.lane.b32.xlu0 %v1861, 20
  %v1865 = vpop.permute.xlu0 %1864
  %v1868 = vrot.slane %v1583, 6
  %v1869 = vrot.slane %v1586, 5
  %v1870 = vsel %vm1662, %v1869, %v1868
  %v1871 = vrot.slane %v1591, 4
  %v1872 = vsel %vm1665, %v1871, %v1870
  %v1873 = vrot.slane %v1594, 3
  %v1874 = vsel %vm1668, %v1873, %v1872
  %v1875 = vrot.slane %v1599, 2
  %v1876 = vsel %vm1671, %v1875, %v1874
  %v1877 = vrot.slane %v1602, 1
  %v1878 = vsel %vm1674, %v1877, %v1876
  %v1879 = vsel %vm1677, %v1607, %v1878
  %v1880 = vrot.slane %v1610, 7
  %v1881 = vsel %vm1680, %v1880, %v1879
  %v1882 = vrot.slane %v1615, 6
  %v1883 = vrot.slane %v1618, 5
  %v1884 = vsel %vm1662, %v1883, %v1882
  %v1885 = vrot.slane %v1623, 4
  %v1886 = vsel %vm1665, %v1885, %v1884
  %v1887 = vrot.slane %v1626, 3
  %v1888 = vsel %vm1668, %v1887, %v1886
  %v1889 = vrot.slane %v1631, 2
  %v1890 = vsel %vm1671, %v1889, %v1888
  %v1891 = vrot.slane %v1634, 1
  %v1892 = vsel %vm1674, %v1891, %v1890
  %v1893 = vsel %vm1677, %v1639, %v1892
  %v1894 = vrot.slane %v1642, 7
  %v1895 = vsel %vm1680, %v1894, %v1893
  %1896 = vrot.lane.b32.xlu0 %v1881, 24
  %v1897 = vpop.permute.xlu0 %1896
  %1898 = vrot.lane.b32.xlu0 %v1895, 24
  %v1899 = vpop.permute.xlu0 %1898
  %v1902 = vrot.slane %v1583, 7
  %v1903 = vrot.slane %v1586, 6
  %v1904 = vsel %vm1662, %v1903, %v1902
  %v1905 = vrot.slane %v1591, 5
  %v1906 = vsel %vm1665, %v1905, %v1904
  %v1907 = vrot.slane %v1594, 4
  %v1908 = vsel %vm1668, %v1907, %v1906
  %v1909 = vrot.slane %v1599, 3
  %v1910 = vsel %vm1671, %v1909, %v1908
  %v1911 = vrot.slane %v1602, 2
  %v1912 = vsel %vm1674, %v1911, %v1910
  %v1913 = vrot.slane %v1607, 1
  %v1914 = vsel %vm1677, %v1913, %v1912
  %v1915 = vsel %vm1680, %v1610, %v1914
  %v1916 = vrot.slane %v1615, 7
  %v1917 = vrot.slane %v1618, 6
  %v1918 = vsel %vm1662, %v1917, %v1916
  %v1919 = vrot.slane %v1623, 5
  %v1920 = vsel %vm1665, %v1919, %v1918
  %v1921 = vrot.slane %v1626, 4
  %v1922 = vsel %vm1668, %v1921, %v1920
  %v1923 = vrot.slane %v1631, 3
  %v1924 = vsel %vm1671, %v1923, %v1922
  %v1925 = vrot.slane %v1634, 2
  %v1926 = vsel %vm1674, %v1925, %v1924
  %v1927 = vrot.slane %v1639, 1
  %v1928 = vsel %vm1677, %v1927, %v1926
  %v1929 = vsel %vm1680, %v1642, %v1928
  %1930 = vrot.lane.b32.xlu0 %v1915, 28
  %v1931 = vpop.permute.xlu0 %1930
  %1932 = vrot.lane.b32.xlu0 %v1929, 28
  %v1933 = vpop.permute.xlu0 %1932
  %v1936 = vsel %vm1172, %v1681, %v1727
  %v1937 = vsel %vm1172, %v1695, %v1729
  %v1938 = vsel %vm1221, %v1936, %v1761
  %v1939 = vsel %vm1221, %v1937, %v1763
  %v1940 = vsel %vm1254, %v1938, %v1795
  %v1941 = vsel %vm1254, %v1939, %v1797
  %v1942 = vsel %vm1287, %v1940, %v1829
  %v1943 = vsel %vm1287, %v1941, %v1831
  %v1944 = vsel %vm1320, %v1942, %v1863
  %v1945 = vsel %vm1320, %v1943, %v1865
  %v1946 = vsel %vm1353, %v1944, %v1897
  %v1947 = vsel %vm1353, %v1945, %v1899
  %v1948 = vsel %vm1386, %v1946, %v1931
  %v1949 = vsel %vm1386, %v1947, %v1933
  %1950 = vst.msk [vmem:[%s3] sm:$0xff] %vm1419, %v1948
  %1951 = vst.msk [vmem:[%s3 + $0x8] sm:$0xff] %vm1419, %v1949
  // Predicated region
  $region14: #{downsample_block.1} parent=0 // pred_check
    _
  $region15: #{downsample_block.1} parent=0 // pred_check_branch
    %1953 = sbr.rel (0) target = $region17
  $region16: #{downsample_block.1} parent=0 // pred_region
    _
  $region17: #{downsample_block.1} parent=0 // pred_fallthru
    _
  // Predicated region
  $region18: #{downsample_block.1} parent=0 // pred_check
    _
  $region19: #{downsample_block.1} parent=0 // pred_check_branch
    %1955 = sbr.rel (0) target = $region21
  $region20: #{downsample_block.1} parent=0 // pred_region
    _
  $region21: #{downsample_block.1} parent=0 // pred_fallthru
    _

</llo_original>
